<compile_context>
chip_gen: v6e
topology: v6e:2x2x1
jax: 0.10.0
libtpu: 0.0.40
codegen_flags: <defaults>
</compile_context>

<pallas_src>
import functools

import jax
import jax.numpy as jnp
from jax.experimental import pallas as pl
from jax.experimental.pallas import tpu as pltpu


def slearner_loss_kernel(xp_ref, w1_ref, b1_ref, w2_ref, b2_ref, w3_ref, b3_ref,
                         loss_ref, acc_ref,
                         *, batch_size, block_rows, blocks_per_core, label_col):
    c = pl.program_id(0)          # core / parallel axis
    i = pl.program_id(1)          # batch-chunk / reduction axis

    @pl.when(i == 0)
    def _():
        acc_ref[...] = jnp.zeros_like(acc_ref)

    xp = xp_ref[...]                                           # (TB, F+2)
    y = xp[:, label_col:label_col + 1].astype(jnp.float32)     # label column

    # Layer 1: packed matmul.  Treatment column is a real weight row of w1_pack,
    # label column multiplies a zero row, so this equals the concat formulation.
    h1 = jnp.dot(xp, w1_ref[...], preferred_element_type=jnp.float32)
    h1 = jnp.maximum(h1 + b1_ref[...], 0.0)

    # Layer 2: MXU matmul (cast only the MXU operand if streaming bf16).
    h1 = h1.astype(w2_ref.dtype)
    h2 = jnp.dot(h1, w2_ref[...], preferred_element_type=jnp.float32)
    h2 = jnp.maximum(h2 + b2_ref[...], 0.0)

    # Layer 3 (N=1 head): VPU multiply + lane reduction, not an MXU matmul.
    z = jnp.sum(h2 * w3_ref[...], axis=-1, keepdims=True) + b3_ref[...]   # (TB, 1)

    # Numerically stable BCE-with-logits, per example (all f32).
    per_example = jnp.maximum(z, 0.0) - z * y + jnp.log1p(jnp.exp(-jnp.abs(z)))

    # Global (virtual) block index for this step.  Only the final / overhanging
    # blocks need the ragged mask; full tiles accumulate unmasked.
    blk = c * blocks_per_core + i
    needs_mask = (blk + 1) * block_rows > batch_size

    @pl.when(needs_mask)
    def _():
        row = blk * block_rows + jax.lax.broadcasted_iota(
            jnp.int32, per_example.shape, 0)
        masked = jnp.where(row < batch_size, per_example, 0.0)
        acc_ref[...] += jnp.sum(masked, keepdims=True)

    @pl.when(jnp.logical_not(needs_mask))
    def _():
        acc_ref[...] += jnp.sum(per_example, keepdims=True)

    @pl.when(i == pl.num_programs(1) - 1)
    def _():
        loss_ref[...] = acc_ref[...].reshape(1, 1, 1)


def _default_vmem_limit():
    """Per-generation VMEM budget: ~96 MiB on v5e/v6e, ~48 MiB on v7x."""
    try:
        info = pltpu.get_tpu_info()
        cap = getattr(info, "vmem_capacity_bytes", None)
        if cap:
            return int(min(96 * 1024 * 1024, (cap * 3) // 4))
    except Exception:
        pass
    return 48 * 1024 * 1024   # safe fallback on every generation


def slearner_calculate_loss(feature_list, is_treat, label_list, params, *,
                            block_rows=4096, num_cores=2, bf16_matmul=False):
    """JAX equivalent of WrapperModel.forward -> model.calculate_loss(...)."""
    w1, b1, w2, b2, w3, b3 = params
    B, F = feature_list.shape
    H1 = w1.shape[1]
    H2 = w2.shape[1]
    P = F + 2                      # features + treatment col + label col

    f32 = jnp.float32
    t = is_treat.astype(f32).reshape(B, 1)
    y = label_list.astype(f32).reshape(B, 1)
    # One packed input stream (features | treat | label).
    # TODO(synk): build this once in the data pipeline, not per step.
    xp = jnp.concatenate([feature_list.astype(f32), t, y], axis=-1)        # (B, P)

    # Fold treatment column into w1; add a zero row for the label column.
    w1_pack = jnp.concatenate(
        [w1.astype(f32), jnp.zeros((P - w1.shape[0], H1), f32)], axis=0)   # (P, H1)
    w2_m = w2.astype(f32)
    b1_r = b1.reshape(1, H1).astype(f32)
    b2_r = b2.reshape(1, H2).astype(f32)
    w3_row = w3.reshape(1, H2).astype(f32)   # head weights as a row (VPU reduce)
    b3_r = b3.reshape(1, 1).astype(f32)

    if bf16_matmul:
        # MXU operands only; post-matmul math / accumulation stay f32.
        xp = xp.astype(jnp.bfloat16)
        w1_pack = w1_pack.astype(jnp.bfloat16)
        w2_m = w2_m.astype(jnp.bfloat16)

    # Batch tiling: one (full) block for small batches, else block_rows rows.
    tb = B if B <= block_rows else block_rows
    nblocks = pl.cdiv(B, tb)
    ncores = max(1, min(num_cores, nblocks))     # don't spawn pure-phantom cores
    bpc = pl.cdiv(nblocks, ncores)               # blocks per core

    kernel = functools.partial(slearner_loss_kernel,
                               batch_size=B, block_rows=tb,
                               blocks_per_core=bpc, label_col=F + 1)

    def resident(shape):
        # Weights: same block every step -> stay resident in VMEM.
        return pl.BlockSpec(shape, lambda c, i: (0, 0))

    # Input block index = c*bpc + i, clamped so phantom blocks (uneven split)
    # re-read a valid block; the in-kernel mask zeroes their contribution.
    x_spec = pl.BlockSpec(
        (tb, P), lambda c, i: (jnp.minimum(c * bpc + i, nblocks - 1), 0))

    grid_spec = pltpu.PrefetchScalarGridSpec(
        num_scalar_prefetch=0,
        grid=(ncores, bpc),
        in_specs=[
            x_spec,                 # packed features|treat|label
            resident((P, H1)),      # w1_pack
            resident((1, H1)),      # b1
            resident((H1, H2)),     # w2
            resident((1, H2)),      # b2
            resident((1, H2)),      # w3 (row)
            resident((1, 1)),       # b3
        ],
        out_specs=pl.BlockSpec((1, 1, 1), lambda c, i: (c, 0, 0)),
        scratch_shapes=[pltpu.VMEM((1, 1), jnp.float32)],   # per-core running sum
    )

    partials = pl.pallas_call(
        kernel,
        out_shape=jax.ShapeDtypeStruct((ncores, 1, 1), jnp.float32),
        grid_spec=grid_spec,
        compiler_params=pltpu.CompilerParams(
            dimension_semantics=("parallel", "arbitrary"),
            vmem_limit_bytes=_default_vmem_limit(),
        ),
    )(xp, w1_pack, b1_r, w2_m, b2_r, w3_row, b3_r)

    return jnp.sum(partials) / jnp.float32(B)


def init_params(key, in_dim, h1, h2):
    """Deterministic parameter init (synthetic; no checkpoint load)."""
    k1, k2, k3, k4, k5, k6 = jax.random.split(key, 6)
    w1 = jax.random.normal(k1, (in_dim, h1), jnp.float32) * (1.0 / jnp.sqrt(in_dim))
    b1 = jax.random.normal(k4, (1, h1), jnp.float32) * 0.1
    w2 = jax.random.normal(k2, (h1, h2), jnp.float32) * (1.0 / jnp.sqrt(h1))
    b2 = jax.random.normal(k5, (1, h2), jnp.float32) * 0.1
    w3 = jax.random.normal(k3, (h2, 1), jnp.float32) * (1.0 / jnp.sqrt(h2))
    b3 = jax.random.normal(k6, (1, 1), jnp.float32) * 0.1
    return (w1, b1, w2, b2, w3, b3)


if __name__ == "__main__":
    # Small Criteo-uplift-style problem: 12 continuous features, small MLP.
    # block_rows=128 here only so that B=200 exercises the multi-block path
    # (one block per core on v7x) AND the ragged-tile mask; production uses the
    # 4096 default.
    B, F = 200, 12
    H1, H2 = 64, 32

    key = jax.random.PRNGKey(0)
    kf, kt, kl, kp = jax.random.split(key, 4)

    feature_list = jax.random.normal(kf, (B, F), jnp.float32)
    is_treat = jax.random.bernoulli(kt, 0.5, (B,)).astype(jnp.float32)
    label_list = jax.random.bernoulli(kl, 0.3, (B,)).astype(jnp.float32)

    params = init_params(kp, F + 1, H1, H2)

    loss = slearner_calculate_loss(feature_list, is_treat, label_list, params,
                                   block_rows=128)
    jax.block_until_ready(loss)

    # Pure-JAX reference (original concat-based formulation, all f32).
    w1, b1, w2, b2, w3, b3 = params
    x_ref = jnp.concatenate([feature_list, is_treat[:, None]], axis=-1)
    h1 = jnp.maximum(x_ref @ w1 + b1, 0.0)
    h2 = jnp.maximum(h1 @ w2 + b2, 0.0)
    z = h2 @ w3 + b3
    y = label_list[:, None]
    ref = jnp.mean(jnp.maximum(z, 0.0) - z * y + jnp.log1p(jnp.exp(-jnp.abs(z))))
    assert jnp.allclose(loss, ref, atol=1e-5, rtol=1e-5), (loss, ref)

    print("KERNEL_OK")
</pallas_src>

<mosaic_0001>
module attributes {stable_mosaic.version = 11 : i64} {
  func.func @slearner_loss_kernel(%arg0: i32, %arg1: i32, %arg2: memref<128x14xf32, #tpu.memory_space<vmem>>, %arg3: memref<14x64xf32, #tpu.memory_space<vmem>>, %arg4: memref<1x64xf32, #tpu.memory_space<vmem>>, %arg5: memref<64x32xf32, #tpu.memory_space<vmem>>, %arg6: memref<1x32xf32, #tpu.memory_space<vmem>>, %arg7: memref<1x32xf32, #tpu.memory_space<vmem>>, %arg8: memref<1x1xf32, #tpu.memory_space<vmem>>, %arg9: memref<1x1x1xf32, #tpu.memory_space<vmem>>, %arg10: memref<1x1xf32, #tpu.memory_space<vmem>>) attributes {dimension_semantics = [#tpu.dimension_semantics<parallel>, #tpu.dimension_semantics<arbitrary>], iteration_bounds = array<i64: 2, 1>, scalar_prefetch = 0 : i64, scratch_operands = 1 : i64, tpu.core_type = #tpu.core_type<tc>, window_params = [{transform_indices = @transform_0, window_bounds = array<i64: 128, 14>}, {pipeline_mode = #tpu.pipeline_mode<synchronous>, transform_indices = @transform_1, window_bounds = array<i64: 14, 64>}, {pipeline_mode = #tpu.pipeline_mode<synchronous>, transform_indices = @transform_2, window_bounds = array<i64: 1, 64>}, {pipeline_mode = #tpu.pipeline_mode<synchronous>, transform_indices = @transform_3, window_bounds = array<i64: 64, 32>}, {pipeline_mode = #tpu.pipeline_mode<synchronous>, transform_indices = @transform_4, window_bounds = array<i64: 1, 32>}, {pipeline_mode = #tpu.pipeline_mode<synchronous>, transform_indices = @transform_5, window_bounds = array<i64: 1, 32>}, {pipeline_mode = #tpu.pipeline_mode<synchronous>, transform_indices = @transform_6, window_bounds = array<i64: 1, 1>}, {transform_indices = @transform_7, window_bounds = array<i64: 1, 1, 1>}]} {
    %c0_i32 = arith.constant 0 : i32
    %0 = arith.cmpi eq, %arg1, %c0_i32 : i32
    %1 = arith.extui %0 : i1 to i32
    %c0_i32_0 = arith.constant 0 : i32
    %2 = arith.cmpi ne, %1, %c0_i32_0 : i32
    scf.if %2 {
      %cst_25 = arith.constant 0.000000e+00 : f32
      %50 = vector.broadcast %cst_25 : f32 to vector<1x1xf32>
      %c0_26 = arith.constant 0 : index
      %c0_27 = arith.constant 0 : index
      %51 = vector.load %arg10[%c0_26, %c0_27] : memref<1x1xf32, #tpu.memory_space<vmem>>, vector<1x1xf32>
      tpu.vector_store %arg10[%c0_26, %c0_27], %50 {strides = array<i32>} : memref<1x1xf32, #tpu.memory_space<vmem>>, vector<1x1xf32>,
    } else {
    }
    %c0 = arith.constant 0 : index
    %c0_1 = arith.constant 0 : index
    %3 = vector.load %arg2[%c0, %c0_1] : memref<128x14xf32, #tpu.memory_space<vmem>>, vector<128x14xf32>
    %4 = vector.extract_strided_slice %3 {offsets = [0, 13], sizes = [128, 1], strides = [1, 1]} : vector<128x14xf32> to vector<128x1xf32>
    %c0_2 = arith.constant 0 : index
    %c0_3 = arith.constant 0 : index
    %5 = vector.load %arg3[%c0_2, %c0_3] : memref<14x64xf32, #tpu.memory_space<vmem>>, vector<14x64xf32>
    %cst = arith.constant dense<0.000000e+00> : vector<128x64xf32>
    %6 = tpu.matmul %3, %5, %cst {dimension_numbers = #tpu.dot_dimension_numbers<[1], [0], [0], [1], [0, 0, 1, 1], [], []>} : vector<128x14xf32>, vector<14x64xf32>, vector<128x64xf32> -> vector<128x64xf32>
    %c0_4 = arith.constant 0 : index
    %c0_5 = arith.constant 0 : index
    %7 = vector.load %arg4[%c0_4, %c0_5] : memref<1x64xf32, #tpu.memory_space<vmem>>, vector<1x64xf32>
    %8 = vector.broadcast %7 : vector<1x64xf32> to vector<128x64xf32>
    %9 = arith.addf %6, %8 : vector<128x64xf32>
    %cst_6 = arith.constant 0.000000e+00 : f32
    %10 = vector.broadcast %cst_6 : f32 to vector<128x64xf32>
    %11 = arith.maximumf %9, %10 : vector<128x64xf32>
    %c0_7 = arith.constant 0 : index
    %c0_8 = arith.constant 0 : index
    %12 = vector.load %arg5[%c0_7, %c0_8] : memref<64x32xf32, #tpu.memory_space<vmem>>, vector<64x32xf32>
    %cst_9 = arith.constant dense<0.000000e+00> : vector<128x32xf32>
    %13 = tpu.matmul %11, %12, %cst_9 {dimension_numbers = #tpu.dot_dimension_numbers<[1], [0], [0], [1], [0, 0, 1, 1], [], []>} : vector<128x64xf32>, vector<64x32xf32>, vector<128x32xf32> -> vector<128x32xf32>
    %c0_10 = arith.constant 0 : index
    %c0_11 = arith.constant 0 : index
    %14 = vector.load %arg6[%c0_10, %c0_11] : memref<1x32xf32, #tpu.memory_space<vmem>>, vector<1x32xf32>
    %15 = vector.broadcast %14 : vector<1x32xf32> to vector<128x32xf32>
    %16 = arith.addf %13, %15 : vector<128x32xf32>
    %cst_12 = arith.constant 0.000000e+00 : f32
    %17 = vector.broadcast %cst_12 : f32 to vector<128x32xf32>
    %18 = arith.maximumf %16, %17 : vector<128x32xf32>
    %c0_13 = arith.constant 0 : index
    %c0_14 = arith.constant 0 : index
    %19 = vector.load %arg7[%c0_13, %c0_14] : memref<1x32xf32, #tpu.memory_space<vmem>>, vector<1x32xf32>
    %20 = vector.broadcast %19 : vector<1x32xf32> to vector<128x32xf32>
    %21 = arith.mulf %18, %20 : vector<128x32xf32>
    %cst_15 = arith.constant dense<0.000000e+00> : vector<128xf32>
    %22 = vector.multi_reduction <add>, %21, %cst_15 [1] : vector<128x32xf32> to vector<128xf32>
    %23 = vector.shape_cast %22 : vector<128xf32> to vector<128x1xf32>
    %c0_16 = arith.constant 0 : index
    %c0_17 = arith.constant 0 : index
    %24 = vector.load %arg8[%c0_16, %c0_17] : memref<1x1xf32, #tpu.memory_space<vmem>>, vector<1x1xf32>
    %25 = vector.broadcast %24 : vector<1x1xf32> to vector<128x1xf32>
    %26 = arith.addf %23, %25 : vector<128x1xf32>
    %cst_18 = arith.constant 0.000000e+00 : f32
    %27 = vector.broadcast %cst_18 : f32 to vector<128x1xf32>
    %28 = arith.maximumf %26, %27 : vector<128x1xf32>
    %29 = arith.mulf %26, %4 : vector<128x1xf32>
    %30 = arith.subf %28, %29 : vector<128x1xf32>
    %31 = math.absf %26 : vector<128x1xf32>
    %cst_19 = arith.constant 0.000000e+00 : f32
    %32 = vector.broadcast %cst_19 : f32 to vector<128x1xf32>
    %33 = arith.subf %32, %31 : vector<128x1xf32>
    %34 = math.exp %33 : vector<128x1xf32>
    %35 = math.log1p %34 : vector<128x1xf32>
    %36 = arith.addf %30, %35 : vector<128x1xf32>
    %c1_i32 = arith.constant 1 : i32
    %37 = arith.muli %arg0, %c1_i32 : i32
    %38 = arith.addi %37, %arg1 : i32
    %c1_i32_20 = arith.constant 1 : i32
    %39 = arith.addi %38, %c1_i32_20 : i32
    %c128_i32 = arith.constant 128 : i32
    %40 = arith.muli %39, %c128_i32 : i32
    %c200_i32 = arith.constant 200 : i32
    %41 = arith.cmpi sgt, %40, %c200_i32 : i32
    %42 = arith.extui %41 : i1 to i32
    %c0_i32_21 = arith.constant 0 : i32
    %43 = arith.cmpi ne, %42, %c0_i32_21 : i32
    scf.if %43 {
      %c128_i32_25 = arith.constant 128 : i32
      %50 = arith.muli %38, %c128_i32_25 : i32
      %51 = tpu.iota {dimensions = array<i32: 0>} : vector<128x1xi32>
      %52 = vector.broadcast %50 : i32 to vector<128x1xi32>
      %53 = arith.addi %52, %51 : vector<128x1xi32>
      %c200_i32_26 = arith.constant 200 : i32
      %54 = vector.broadcast %c200_i32_26 : i32 to vector<128x1xi32>
      %55 = arith.cmpi slt, %53, %54 : vector<128x1xi32>
      %cst_27 = arith.constant 0.000000e+00 : f32
      %56 = vector.broadcast %cst_27 : f32 to vector<128x1xf32>
      %57 = arith.select %55, %36, %56 : vector<128x1xi1>, vector<128x1xf32>
      %c0_28 = arith.constant 0 : index
      %c0_29 = arith.constant 0 : index
      %58 = vector.load %arg10[%c0_28, %c0_29] : memref<1x1xf32, #tpu.memory_space<vmem>>, vector<1x1xf32>
      %59 = vector.shape_cast %57 : vector<128x1xf32> to vector<1x128x1xf32>
      %cst_30 = arith.constant dense<0.000000e+00> : vector<1xf32>
      %60 = vector.multi_reduction <add>, %59, %cst_30 [1, 2] : vector<1x128x1xf32> to vector<1xf32>
      %61 = vector.shape_cast %60 : vector<1xf32> to vector<1x1x1xf32>
      %62 = vector.extract %61[0, 0, 0] : f32 from vector<1x1x1xf32>
      %63 = vector.broadcast %62 : f32 to vector<1x1xf32>
      %64 = arith.addf %58, %63 : vector<1x1xf32>
      %c0_31 = arith.constant 0 : index
      %c0_32 = arith.constant 0 : index
      %65 = vector.load %arg10[%c0_31, %c0_32] : memref<1x1xf32, #tpu.memory_space<vmem>>, vector<1x1xf32>
      tpu.vector_store %arg10[%c0_31, %c0_32], %64 {strides = array<i32>} : memref<1x1xf32, #tpu.memory_space<vmem>>, vector<1x1xf32>,
    } else {
    }
    %true = arith.constant true
    %44 = arith.xori %41, %true : i1
    %45 = arith.extui %44 : i1 to i32
    %c0_i32_22 = arith.constant 0 : i32
    %46 = arith.cmpi ne, %45, %c0_i32_22 : i32
    scf.if %46 {
      %c0_25 = arith.constant 0 : index
      %c0_26 = arith.constant 0 : index
      %50 = vector.load %arg10[%c0_25, %c0_26] : memref<1x1xf32, #tpu.memory_space<vmem>>, vector<1x1xf32>
      %51 = vector.shape_cast %36 : vector<128x1xf32> to vector<1x128x1xf32>
      %cst_27 = arith.constant dense<0.000000e+00> : vector<1xf32>
      %52 = vector.multi_reduction <add>, %51, %cst_27 [1, 2] : vector<1x128x1xf32> to vector<1xf32>
      %53 = vector.shape_cast %52 : vector<1xf32> to vector<1x1x1xf32>
      %54 = vector.extract %53[0, 0, 0] : f32 from vector<1x1x1xf32>
      %55 = vector.broadcast %54 : f32 to vector<1x1xf32>
      %56 = arith.addf %50, %55 : vector<1x1xf32>
      %c0_28 = arith.constant 0 : index
      %c0_29 = arith.constant 0 : index
      %57 = vector.load %arg10[%c0_28, %c0_29] : memref<1x1xf32, #tpu.memory_space<vmem>>, vector<1x1xf32>
      tpu.vector_store %arg10[%c0_28, %c0_29], %56 {strides = array<i32>} : memref<1x1xf32, #tpu.memory_space<vmem>>, vector<1x1xf32>,
    } else {
    }
    %c0_i32_23 = arith.constant 0 : i32
    %47 = arith.cmpi eq, %arg1, %c0_i32_23 : i32
    %48 = arith.extui %47 : i1 to i32
    %c0_i32_24 = arith.constant 0 : i32
    %49 = arith.cmpi ne, %48, %c0_i32_24 : i32
    scf.if %49 {
      %c0_25 = arith.constant 0 : index
      %c0_26 = arith.constant 0 : index
      %50 = vector.load %arg10[%c0_25, %c0_26] : memref<1x1xf32, #tpu.memory_space<vmem>>, vector<1x1xf32>
      %51 = vector.shape_cast %50 : vector<1x1xf32> to vector<1x1x1xf32>
      %c0_27 = arith.constant 0 : index
      %c0_28 = arith.constant 0 : index
      %c0_29 = arith.constant 0 : index
      %52 = vector.load %arg9[%c0_27, %c0_28, %c0_29] : memref<1x1x1xf32, #tpu.memory_space<vmem>>, vector<1x1x1xf32>
      tpu.vector_store %arg9[%c0_27, %c0_28, %c0_29], %51 {strides = array<i32>} : memref<1x1x1xf32, #tpu.memory_space<vmem>>, vector<1x1x1xf32>,
    } else {
    }
    return
  }
  func.func @transform_0(%arg0: i32, %arg1: i32) -> (i32, i32) {
    %c1_i32 = arith.constant 1 : i32
    %0 = arith.muli %arg0, %c1_i32 : i32
    %1 = arith.addi %0, %arg1 : i32
    %c1_i32_0 = arith.constant 1 : i32
    %2 = arith.minsi %1, %c1_i32_0 : i32
    %c0_i32 = arith.constant 0 : i32
    %c0_i32_1 = arith.constant 0 : i32
    return %2, %c0_i32 : i32, i32
  }
  func.func @transform_1(%arg0: i32, %arg1: i32) -> (i32, i32) {
    %c0_i32 = arith.constant 0 : i32
    %c0_i32_0 = arith.constant 0 : i32
    %c0_i32_1 = arith.constant 0 : i32
    return %c0_i32, %c0_i32_0 : i32, i32
  }
  func.func @transform_2(%arg0: i32, %arg1: i32) -> (i32, i32) {
    %c0_i32 = arith.constant 0 : i32
    %c0_i32_0 = arith.constant 0 : i32
    %c0_i32_1 = arith.constant 0 : i32
    return %c0_i32, %c0_i32_0 : i32, i32
  }
  func.func @transform_3(%arg0: i32, %arg1: i32) -> (i32, i32) {
    %c0_i32 = arith.constant 0 : i32
    %c0_i32_0 = arith.constant 0 : i32
    %c0_i32_1 = arith.constant 0 : i32
    return %c0_i32, %c0_i32_0 : i32, i32
  }
  func.func @transform_4(%arg0: i32, %arg1: i32) -> (i32, i32) {
    %c0_i32 = arith.constant 0 : i32
    %c0_i32_0 = arith.constant 0 : i32
    %c0_i32_1 = arith.constant 0 : i32
    return %c0_i32, %c0_i32_0 : i32, i32
  }
  func.func @transform_5(%arg0: i32, %arg1: i32) -> (i32, i32) {
    %c0_i32 = arith.constant 0 : i32
    %c0_i32_0 = arith.constant 0 : i32
    %c0_i32_1 = arith.constant 0 : i32
    return %c0_i32, %c0_i32_0 : i32, i32
  }
  func.func @transform_6(%arg0: i32, %arg1: i32) -> (i32, i32) {
    %c0_i32 = arith.constant 0 : i32
    %c0_i32_0 = arith.constant 0 : i32
    %c0_i32_1 = arith.constant 0 : i32
    return %c0_i32, %c0_i32_0 : i32, i32
  }
  func.func @transform_7(%arg0: i32, %arg1: i32) -> (i32, i32, i32) {
    %c0_i32 = arith.constant 0 : i32
    %c0_i32_0 = arith.constant 0 : i32
    %c0_i32_1 = arith.constant 0 : i32
    return %arg0, %c0_i32, %c0_i32_0 : i32, i32, i32
  }
}

</mosaic_0001>

<llo_original>
// kernel: tpu_custom_call.1
$region0: #{tpu_custom_call.1}
  #allocation0 [shape = 'u32[]', space=smem, size = 0x4, offset = 0x4, fixed_abs, tag = 'smem constant byte address 0x4 - core index']
  #allocation1 [shape = 'u32[144,128]{1,0:T(1,128)}', space=vmem, size = 0x12000, scoped, tag = 'internal scratch']
  #allocation2 [shape = 'f32[1,1]{1,0:T(1,128)}', space=vmem, size = 0x200, scoped, tag = 'scratch operand']
  #allocation3 [shape = 'f32[1,1]{1,0:T(1,128)S(1)}', space=vmem, size = 0x200, scoped, tag = 'scoped memory for tpu_custom_call.1']
  %s0 = inlined_call_operand.vmem [shape: f32[200,14], index: 0, kind: input, shape index: {}]
  %s1 = inlined_call_operand.vmem [shape: f32[14,64], index: 1, kind: input, shape index: {}]
  %s2 = inlined_call_operand.vmem [shape: f32[1,64], index: 2, kind: input, shape index: {}]
  %s3 = inlined_call_operand.vmem [shape: f32[64,32], index: 3, kind: input, shape index: {}]
  %s4 = inlined_call_operand.vmem [shape: f32[1,32], index: 4, kind: input, shape index: {}]
  %s5 = inlined_call_operand.vmem [shape: f32[1,32], index: 5, kind: input, shape index: {}]
  %s6 = inlined_call_operand.<no memory space> [shape: f32[1,1], index: 6, kind: input, shape index: {}]
  %s7 = inlined_call_operand.vmem [shape: f32[2,1,1], index: 7, kind: output, shape index: {}]
  %s8 = sld [smem:[#allocation0]]
  $region77: #{tpu_custom_call.1} parent=0
    _
  %s10 = ssub.s32 1, %s8
  %s11 = scalar_select 0, %s10, %s8
  %v12 = vstv %s6
  %13 = vst [vmem:[#allocation3] sm:$0x1] %v12
  loop: start=0, step=1, limit=4
  $region2: #{tpu_custom_call.1} parent=0 // loop_pre_header
    _
  $region3: #{tpu_custom_call.1} parent=0 // loop_header
    %s15 = sphi 0, %s19
    %p16 = scmp.ge.s32.totalorder %s15, 4
    %s22 = sphi 0, %s34
    %s23 = sphi 0, %s30
    %s24 = sphi 0, %s22
    %s25 = sphi 0, %s23
    %s26 = sphi 0, %s24
    %s27 = sphi 0, %s25
    %s43 = sphi 0, %s45
    %s46 = sphi 0, %s43
    %s47 = sphi 0, %s46
    %s63 = sphi 0, %s47
    %s67 = sphi 0, %s67
    %s69 = sphi 0, %s67
    %s70 = sphi 0, %s69
    %s84 = sphi 0, %s70
    %s88 = sphi 0, %s88
    %s90 = sphi 0, %s88
    %s91 = sphi 0, %s90
    %s105 = sphi 0, %s91
    %s109 = sphi 0, %s109
    %s111 = sphi 0, %s109
    %s112 = sphi 0, %s111
    %s126 = sphi 0, %s112
    %s130 = sphi 0, %s130
    %s132 = sphi 0, %s130
    %s133 = sphi 0, %s132
    %s147 = sphi 0, %s133
    %s151 = sphi 0, %s151
    %s153 = sphi 0, %s151
    %s154 = sphi 0, %s153
    %s168 = sphi 0, %s154
    %s172 = sphi 0, %s172
    %s174 = sphi 0, %s172
    %s175 = sphi 0, %s174
    %s189 = sphi 0, %s175
    %s195 = sphi 0, %s197
    %s198 = sphi 0, %s195
    %s199 = sphi 0, %s198
    %s215 = sphi 0, %s199
  $region4: #{tpu_custom_call.1} parent=0 // loop_header_branch
    %18 = sbr.rel (%p16) target = $region8
  $region5: #{tpu_custom_call.1} parent=0 // loop_body
    %s20 = ssub.s32 %s15, 1
    %s21 = ssub.s32 %s15, 2
    %s28 = sadd.s32 1, %s23
    %p29 = scmp.ge.s32.totalorder %s28, 1
    %s30 = scalar_select %p29, 0, %s28
    %s31 = sadd.s32 1, %s22
    %s32 = scalar_select %p29, %s31, %s22
    %p33 = scmp.ge.s32.totalorder %s32, 2
    %s34 = scalar_select %p33, 0, %s32
    %s35 = sadd.s32 %s22, %s23
    %p36 = scmp.lt.s32.totalorder %s35, 1
    %s37 = scalar_select %p36, %s35, 1
    %s38 = sadd.s32 %s34, %s30
    %p39 = scmp.lt.s32.totalorder %s38, 1
    %s40 = scalar_select %p39, %s38, 1
    %s41 = ssub.s32 %s37, %s40
    %p42 = scmp.eq.s32.totalorder %s41, 0
    %s44 = sadd.s32 %s43, 1
    %s45 = scalar_select %p42, %s43, %s44
    %p48 = pneg %p42
    %p49 = scmp.eq.s32.totalorder %s15, 1
    %p50 = por %p48, %p49
    %p51 = scmp.ne.s32.totalorder %s43, %s46
    %p52 = scmp.eq.s32.totalorder %s15, 0
    %p53 = por %p51, %p52
    %p54 = scmp.ne.s32.totalorder %s43, %s46
    %p55 = scmp.eq.s32.totalorder %s20, 1
    %p56 = por %p54, %p55
    %p57 = scmp.ne.s32.totalorder %s46, %s47
    %p58 = scmp.eq.s32.totalorder %s20, 0
    %p59 = por %p57, %p58
    %p60 = scmp.ne.s32.totalorder %s46, %s47
    %p61 = scmp.eq.s32.totalorder %s21, 1
    %p62 = por %p60, %p61
    %p64 = scmp.ne.s32.totalorder %s47, %s63
    %p65 = scmp.eq.s32.totalorder %s21, 0
    %p66 = por %p64, %p65
    %s68 = sadd.s32 %s67, 1
    %p71 = scmp.eq.s32.totalorder %s15, 1
    %p72 = scmp.ne.s32.totalorder %s67, %s69
    %p73 = scmp.eq.s32.totalorder %s15, 0
    %p74 = por %p72, %p73
    %p75 = scmp.ne.s32.totalorder %s67, %s69
    %p76 = scmp.eq.s32.totalorder %s20, 1
    %p77 = por %p75, %p76
    %p78 = scmp.ne.s32.totalorder %s69, %s70
    %p79 = scmp.eq.s32.totalorder %s20, 0
    %p80 = por %p78, %p79
    %p81 = scmp.ne.s32.totalorder %s69, %s70
    %p82 = scmp.eq.s32.totalorder %s21, 1
    %p83 = por %p81, %p82
    %p85 = scmp.ne.s32.totalorder %s70, %s84
    %p86 = scmp.eq.s32.totalorder %s21, 0
    %p87 = por %p85, %p86
    %s89 = sadd.s32 %s88, 1
    %p92 = scmp.eq.s32.totalorder %s15, 1
    %p93 = scmp.ne.s32.totalorder %s88, %s90
    %p94 = scmp.eq.s32.totalorder %s15, 0
    %p95 = por %p93, %p94
    %p96 = scmp.ne.s32.totalorder %s88, %s90
    %p97 = scmp.eq.s32.totalorder %s20, 1
    %p98 = por %p96, %p97
    %p99 = scmp.ne.s32.totalorder %s90, %s91
    %p100 = scmp.eq.s32.totalorder %s20, 0
    %p101 = por %p99, %p100
    %p102 = scmp.ne.s32.totalorder %s90, %s91
    %p103 = scmp.eq.s32.totalorder %s21, 1
    %p104 = por %p102, %p103
    %p106 = scmp.ne.s32.totalorder %s91, %s105
    %p107 = scmp.eq.s32.totalorder %s21, 0
    %p108 = por %p106, %p107
    %s110 = sadd.s32 %s109, 1
    %p113 = scmp.eq.s32.totalorder %s15, 1
    %p114 = scmp.ne.s32.totalorder %s109, %s111
    %p115 = scmp.eq.s32.totalorder %s15, 0
    %p116 = por %p114, %p115
    %p117 = scmp.ne.s32.totalorder %s109, %s111
    %p118 = scmp.eq.s32.totalorder %s20, 1
    %p119 = por %p117, %p118
    %p120 = scmp.ne.s32.totalorder %s111, %s112
    %p121 = scmp.eq.s32.totalorder %s20, 0
    %p122 = por %p120, %p121
    %p123 = scmp.ne.s32.totalorder %s111, %s112
    %p124 = scmp.eq.s32.totalorder %s21, 1
    %p125 = por %p123, %p124
    %p127 = scmp.ne.s32.totalorder %s112, %s126
    %p128 = scmp.eq.s32.totalorder %s21, 0
    %p129 = por %p127, %p128
    %s131 = sadd.s32 %s130, 1
    %p134 = scmp.eq.s32.totalorder %s15, 1
    %p135 = scmp.ne.s32.totalorder %s130, %s132
    %p136 = scmp.eq.s32.totalorder %s15, 0
    %p137 = por %p135, %p136
    %p138 = scmp.ne.s32.totalorder %s130, %s132
    %p139 = scmp.eq.s32.totalorder %s20, 1
    %p140 = por %p138, %p139
    %p141 = scmp.ne.s32.totalorder %s132, %s133
    %p142 = scmp.eq.s32.totalorder %s20, 0
    %p143 = por %p141, %p142
    %p144 = scmp.ne.s32.totalorder %s132, %s133
    %p145 = scmp.eq.s32.totalorder %s21, 1
    %p146 = por %p144, %p145
    %p148 = scmp.ne.s32.totalorder %s133, %s147
    %p149 = scmp.eq.s32.totalorder %s21, 0
    %p150 = por %p148, %p149
    %s152 = sadd.s32 %s151, 1
    %p155 = scmp.eq.s32.totalorder %s15, 1
    %p156 = scmp.ne.s32.totalorder %s151, %s153
    %p157 = scmp.eq.s32.totalorder %s15, 0
    %p158 = por %p156, %p157
    %p159 = scmp.ne.s32.totalorder %s151, %s153
    %p160 = scmp.eq.s32.totalorder %s20, 1
    %p161 = por %p159, %p160
    %p162 = scmp.ne.s32.totalorder %s153, %s154
    %p163 = scmp.eq.s32.totalorder %s20, 0
    %p164 = por %p162, %p163
    %p165 = scmp.ne.s32.totalorder %s153, %s154
    %p166 = scmp.eq.s32.totalorder %s21, 1
    %p167 = por %p165, %p166
    %p169 = scmp.ne.s32.totalorder %s154, %s168
    %p170 = scmp.eq.s32.totalorder %s21, 0
    %p171 = por %p169, %p170
    %s173 = sadd.s32 %s172, 1
    %p176 = scmp.eq.s32.totalorder %s15, 1
    %p177 = scmp.ne.s32.totalorder %s172, %s174
    %p178 = scmp.eq.s32.totalorder %s15, 0
    %p179 = por %p177, %p178
    %p180 = scmp.ne.s32.totalorder %s172, %s174
    %p181 = scmp.eq.s32.totalorder %s20, 1
    %p182 = por %p180, %p181
    %p183 = scmp.ne.s32.totalorder %s174, %s175
    %p184 = scmp.eq.s32.totalorder %s20, 0
    %p185 = por %p183, %p184
    %p186 = scmp.ne.s32.totalorder %s174, %s175
    %p187 = scmp.eq.s32.totalorder %s21, 1
    %p188 = por %p186, %p187
    %p190 = scmp.ne.s32.totalorder %s175, %s189
    %p191 = scmp.eq.s32.totalorder %s21, 0
    %p192 = por %p190, %p191
    %s193 = ssub.s32 %s22, %s34
    %p194 = scmp.eq.s32.totalorder %s193, 0
    %s196 = sadd.s32 %s195, 1
    %s197 = scalar_select %p194, %s195, %s196
    %p200 = pneg %p194
    %p201 = scmp.eq.s32.totalorder %s15, 1
    %p202 = por %p200, %p201
    %p203 = scmp.ne.s32.totalorder %s195, %s198
    %p204 = scmp.eq.s32.totalorder %s15, 0
    %p205 = por %p203, %p204
    %p206 = scmp.ne.s32.totalorder %s195, %s198
    %p207 = scmp.eq.s32.totalorder %s20, 1
    %p208 = por %p206, %p207
    %p209 = scmp.ne.s32.totalorder %s198, %s199
    %p210 = scmp.eq.s32.totalorder %s20, 0
    %p211 = por %p209, %p210
    %p212 = scmp.ne.s32.totalorder %s198, %s199
    %p213 = scmp.eq.s32.totalorder %s21, 1
    %p214 = por %p212, %p213
    %p216 = scmp.ne.s32.totalorder %s199, %s215
    %p217 = scmp.eq.s32.totalorder %s21, 0
    %p218 = por %p216, %p217
    %p219 = scmp.le.s32.totalorder 1, %s15
    %p220 = scmp.lt.s32.totalorder %s15, 3
    %p221 = pnand %p219, %p220
    %p222 = pneg %p221
    // Predicated region
    $region9: #{tpu_custom_call.1} parent=5 // pred_check
      _
    $region10: #{tpu_custom_call.1} parent=5 // pred_check_branch
      %224 = sbr.rel (%p221) target = $region12
    $region11: #{tpu_custom_call.1} parent=5 // pred_region
      %s225 = ssub.s32 %s15, 1
      // Predicated region
      $region13: #{tpu_custom_call.1} parent=11 // pred_check
        %p226 = pneg %p80
      $region14: #{tpu_custom_call.1} parent=11 // pred_check_branch
        %228 = sbr.rel (%p226) target = $region16
      $region15: #{tpu_custom_call.1} parent=11 // pred_region
        _
      $region16: #{tpu_custom_call.1} parent=11 // pred_fallthru
        _
      // Predicated region
      $region17: #{tpu_custom_call.1} parent=11 // pred_check
        %p229 = pneg %p101
      $region18: #{tpu_custom_call.1} parent=11 // pred_check_branch
        %231 = sbr.rel (%p229) target = $region20
      $region19: #{tpu_custom_call.1} parent=11 // pred_region
        _
      $region20: #{tpu_custom_call.1} parent=11 // pred_fallthru
        _
      // Predicated region
      $region21: #{tpu_custom_call.1} parent=11 // pred_check
        %p232 = pneg %p122
      $region22: #{tpu_custom_call.1} parent=11 // pred_check_branch
        %234 = sbr.rel (%p232) target = $region24
      $region23: #{tpu_custom_call.1} parent=11 // pred_region
        _
      $region24: #{tpu_custom_call.1} parent=11 // pred_fallthru
        _
      // Predicated region
      $region25: #{tpu_custom_call.1} parent=11 // pred_check
        %p235 = pneg %p143
      $region26: #{tpu_custom_call.1} parent=11 // pred_check_branch
        %237 = sbr.rel (%p235) target = $region28
      $region27: #{tpu_custom_call.1} parent=11 // pred_region
        _
      $region28: #{tpu_custom_call.1} parent=11 // pred_fallthru
        _
      // Predicated region
      $region29: #{tpu_custom_call.1} parent=11 // pred_check
        %p238 = pneg %p164
      $region30: #{tpu_custom_call.1} parent=11 // pred_check_branch
        %240 = sbr.rel (%p238) target = $region32
      $region31: #{tpu_custom_call.1} parent=11 // pred_region
        _
      $region32: #{tpu_custom_call.1} parent=11 // pred_fallthru
        _
      // Predicated region
      $region33: #{tpu_custom_call.1} parent=11 // pred_check
        %p241 = pneg %p185
      $region34: #{tpu_custom_call.1} parent=11 // pred_check_branch
        %243 = sbr.rel (%p241) target = $region36
      $region35: #{tpu_custom_call.1} parent=11 // pred_region
        _
      $region36: #{tpu_custom_call.1} parent=11 // pred_fallthru
        _
    $region12: #{tpu_custom_call.1} parent=5 // pred_fallthru
      _
    %p244 = scmp.lt.s32.totalorder %s15, 2
    // Predicated region
    $region37: #{tpu_custom_call.1} parent=5 // pred_check
      %p245 = pneg %p244
    $region38: #{tpu_custom_call.1} parent=5 // pred_check_branch
      %247 = sbr.rel (%p245) target = $region40
    $region39: #{tpu_custom_call.1} parent=5 // pred_region
      // Predicated region
      $region41: #{tpu_custom_call.1} parent=39 // pred_check
        %p248 = pneg %p53
      $region42: #{tpu_custom_call.1} parent=39 // pred_check_branch
        %250 = sbr.rel (%p248) target = $region44
      $region43: #{tpu_custom_call.1} parent=39 // pred_region
        %s251 = sadd.s32 %s22, %s23
        %p252 = scmp.lt.s32.totalorder %s251, 1
        %s253 = scalar_select %p252, %s251, 1
        %s254 = smul.u32 16, %s253
        %s255 = ssub.s32 25, %s254
        %p256 = scmp.lt.s32.totalorder %s255, 16
        %s257 = scalar_select %p256, %s255, 16
        %s258 = smul.u32 128, %s257
        %p259 = scmp.lt.s32.totalorder %s254, 24
        %s260 = scalar_select %p259, %s254, 24
        %s261 = smul.addr %s260, 8
        %s262 = scalar_lea.vmem %s0, %s261
        %s263 = sadd.s32 %s22, %s23
        %p264 = scmp.lt.s32.totalorder %s263, 1
        %s265 = scalar_select %p264, %s263, 1
        %s266 = smul.u32 16, %s265
        %s267 = ssub.s32 25, %s266
        %p268 = scmp.lt.s32.totalorder %s267, 16
        %s269 = scalar_select %p268, %s267, 16
        %s270 = smul.u32 128, %s269
      $region44: #{tpu_custom_call.1} parent=39 // pred_fallthru
        _
    $region40: #{tpu_custom_call.1} parent=5 // pred_fallthru
      _
    %p271 = scmp.le.s32.totalorder 1, %s15
    %p272 = scmp.lt.s32.totalorder %s15, 3
    %p273 = pnand %p271, %p272
    %p274 = pneg %p273
    // Predicated region
    $region45: #{tpu_custom_call.1} parent=5 // pred_check
      _
    $region46: #{tpu_custom_call.1} parent=5 // pred_check_branch
      %276 = sbr.rel (%p273) target = $region48
    $region47: #{tpu_custom_call.1} parent=5 // pred_region
      %s277 = ssub.s32 %s15, 1
      %s278 = sadd.s32 %s24, %s25
      %p279 = scmp.lt.s32.totalorder %s278, 1
      %s280 = scalar_select %p279, %s278, 1
      %s281 = smul.u32 16, %s280
      %s282 = ssub.s32 25, %s281
      %p283 = scmp.lt.s32.totalorder %s282, 16
      %s284 = scalar_select %p283, %s282, 16
      %s285 = smul.u32 128, %s284
      %p286 = scmp.lt.s32.totalorder %s281, 24
      %s287 = scalar_select %p286, %s281, 24
      %s288 = smul.addr %s287, 8
      %s289 = scalar_lea.vmem %s0, %s288
      %p290 = pneg %p59
      %p291 = pneg %p56
      %p292 = pneg %p80
      %p293 = pneg %p77
      %p294 = pneg %p101
      %p295 = pneg %p98
      %p296 = pneg %p122
      %p297 = pneg %p119
      %p298 = pneg %p143
      %p299 = pneg %p140
      %p300 = pneg %p164
      %p301 = pneg %p161
      %p302 = pneg %p185
      %p303 = pneg %p182
      %p304 = pneg %p211
      %p305 = pneg %p208
      %p306 = scmp.lt.s32.totalorder %s24, 1
      %s307 = scalar_select %p306, %s24, 1
      %s308 = scalar_lea.vmem %s7, %s307
      %s309 = sadd.s32 %s24, %s25
      %p310 = scmp.lt.s32.totalorder %s309, 1
      %s311 = scalar_select %p310, %s309, 1
      %s312 = smul.u32 16, %s311
      %s313 = ssub.s32 25, %s312
      %p314 = scmp.lt.s32.totalorder %s313, 16
      %s315 = scalar_select %p314, %s313, 16
      %s316 = smul.u32 128, %s315
      %p317 = scmp.lt.s32.totalorder %s312, 24
      %s318 = scalar_select %p317, %s312, 24
      %s319 = smul.addr %s318, 8
      %s320 = scalar_lea.vmem %s0, %s319
      %s321 = sadd.s32 %s24, %s25
      %p322 = scmp.lt.s32.totalorder %s321, 1
      %s323 = scalar_select %p322, %s321, 1
      %s324 = smul.u32 16, %s323
      %s325 = ssub.s32 25, %s324
      %p326 = scmp.lt.s32.totalorder %s325, 16
      %s327 = scalar_select %p326, %s325, 16
      %s328 = smul.u32 128, %s327
      %p329 = scmp.lt.s32.totalorder %s24, 1
      %s330 = scalar_select %p329, %s24, 1
      %s331 = scalar_lea.vmem %s7, %s330
      %p332 = scmp.eq.s32.totalorder %s25, 0
      // Predicated region
      $region49: #{tpu_custom_call.1} parent=47 // pred_check
        %p333 = pneg %p332
      $region50: #{tpu_custom_call.1} parent=47 // pred_check_branch
        %335 = sbr.rel (%p333) target = $region52
      $region51: #{tpu_custom_call.1} parent=47 // pred_region
        %vm336 = vcmask 0
        %337 = vst.msk [vmem:[#allocation2] sm:$0x1] %vm336, 0.0
      $region52: #{tpu_custom_call.1} parent=47 // pred_fallthru
        _
      %v338 = vld [vmem:[%s320] sm:$0xff]
      %v339 = vld [vmem:[%s320 + $0x8] sm:$0xff]
      %v340 = vld [vmem:[%s320 + $0x10] sm:$0xff]
      %v341 = vld [vmem:[%s320 + $0x18] sm:$0xff]
      %v342 = vld [vmem:[%s320 + $0x20] sm:$0xff]
      %v343 = vld [vmem:[%s320 + $0x28] sm:$0xff]
      %v344 = vld [vmem:[%s320 + $0x30] sm:$0xff]
      %v345 = vld [vmem:[%s320 + $0x38] sm:$0xff]
      %v346 = vld [vmem:[%s320 + $0x40] sm:$0xff]
      %v347 = vld [vmem:[%s320 + $0x48] sm:$0xff]
      %v348 = vld [vmem:[%s320 + $0x50] sm:$0xff]
      %v349 = vld [vmem:[%s320 + $0x58] sm:$0xff]
      %v350 = vld [vmem:[%s320 + $0x60] sm:$0xff]
      %v351 = vld [vmem:[%s320 + $0x68] sm:$0xff]
      %v352 = vld [vmem:[%s320 + $0x70] sm:$0xff]
      %v353 = vld [vmem:[%s320 + $0x78] sm:$0xff]
      %v354 = vld [vmem:[%s1] sm:$0xff]
      %v355 = vld [vmem:[%s1 + $0x8] sm:$0x3f]
      %v356 = vld [vmem:[%s2] sm:$0x1]
      %v358 = vlaneseq
      %v359 = vshrl.u32 %v358, 7
      %v360 = vsub.s32 0, %v359
      %v361 = vrot.slane %v356, %v360
      %vm363 = vcmask 113664
      %v365 = vsel %vm363, %v338, 0
      %v368 = vsel %vm363, %v339, 0
      %v371 = vsel %vm363, %v340, 0
      %v374 = vsel %vm363, %v341, 0
      %v377 = vsel %vm363, %v342, 0
      %v380 = vsel %vm363, %v343, 0
      %v383 = vsel %vm363, %v344, 0
      %v386 = vsel %vm363, %v345, 0
      %v389 = vsel %vm363, %v346, 0
      %v392 = vsel %vm363, %v347, 0
      %v395 = vsel %vm363, %v348, 0
      %v398 = vsel %vm363, %v349, 0
      %v401 = vsel %vm363, %v350, 0
      %v404 = vsel %vm363, %v351, 0
      %v407 = vsel %vm363, %v352, 0
      %v410 = vsel %vm363, %v353, 0
      %vm412 = vcmask 1045504
      %v414 = vsel %vm412, %v355, 0
      %416 = vmatprep.subr.mxu0 0.0
      %417 = vmatpush1.msra.mxu0 0.0
      %418 = vmatprep.subr.mxu0 0.0
      %419 = vmatpush1.msra.mxu0 0.0
      %420 = vmatprep.subr.mxu0 0.0
      %421 = vmatpush1.msra.mxu0 0.0
      %422 = vmatprep.subr.mxu0 0.0
      %423 = vmatpush1.msra.mxu0 0.0
      %424 = vmatprep.subr.mxu0 0.0
      %425 = vmatpush1.msra.mxu0 0.0
      %426 = vmatprep.subr.mxu0 0.0
      %427 = vmatpush1.msra.mxu0 0.0
      %428 = vmatprep.subr.mxu0 0.0
      %429 = vmatpush1.msra.mxu0 0.0
      %430 = vmatprep.subr.mxu0 0.0
      %431 = vmatpush1.msra.mxu0 0.0
      %432 = vmatprep.subr.mxu0 0.0
      %433 = vmatpush1.msra.mxu0 0.0
      %434 = vmatprep.subr.mxu0 0.0
      %435 = vmatpush1.msra.mxu0 0.0
      %436 = vmatprep.subr.mxu0 0.0
      %437 = vmatpush1.msra.mxu0 0.0
      %438 = vmatprep.subr.mxu0 0.0
      %439 = vmatpush1.msra.mxu0 0.0
      %440 = vmatprep.subr.mxu0 0.0
      %441 = vmatpush1.msra.mxu0 0.0
      %442 = vmatprep.subr.mxu0 0.0
      %443 = vmatpush1.msra.mxu0 0.0
      %444 = vmatprep.subr.mxu0 0.0
      %445 = vmatpush1.msra.mxu0 %v414
      %446 = vmatprep.subr.mxu0 0.0
      %447 = vmatpush1.msra.mxu0 %v354
      %448 = vmatprep.subr.mxu0 0.0
      %449 = vmatpush2.msra.mxu0 0.0
      %450 = vmatprep.subr.mxu0 0.0
      %451 = vmatpush2.msra.mxu0 0.0
      %452 = vmatprep.subr.mxu0 0.0
      %453 = vmatpush2.msra.mxu0 0.0
      %454 = vmatprep.subr.mxu0 0.0
      %455 = vmatpush2.msra.mxu0 0.0
      %456 = vmatprep.subr.mxu0 0.0
      %457 = vmatpush2.msra.mxu0 0.0
      %458 = vmatprep.subr.mxu0 0.0
      %459 = vmatpush2.msra.mxu0 0.0
      %460 = vmatprep.subr.mxu0 0.0
      %461 = vmatpush2.msra.mxu0 0.0
      %462 = vmatprep.subr.mxu0 0.0
      %463 = vmatpush2.msra.mxu0 0.0
      %464 = vmatprep.subr.mxu0 0.0
      %465 = vmatpush2.msra.mxu0 0.0
      %466 = vmatprep.subr.mxu0 0.0
      %467 = vmatpush2.msra.mxu0 0.0
      %468 = vmatprep.subr.mxu0 0.0
      %469 = vmatpush2.msra.mxu0 0.0
      %470 = vmatprep.subr.mxu0 0.0
      %471 = vmatpush2.msra.mxu0 0.0
      %472 = vmatprep.subr.mxu0 0.0
      %473 = vmatpush2.msra.mxu0 0.0
      %474 = vmatprep.subr.mxu0 0.0
      %475 = vmatpush2.msra.mxu0 0.0
      %476 = vmatprep.subr.mxu0 0.0
      %477 = vmatpush2.msra.mxu0 0.0
      %478 = vmatprep.subr.mxu0 0.0
      %479 = vmatpush2.msra.mxu0 0.0
      %480 = vmatprep.mubr.f32.mxu0 0.0
      %481 = vmatmul.mubr.f32.gmra.mxu0 %v365
      %v482 = vpop.f32.mrf.mxu0
      %v483 = vadd.f32 %v361, %v482
      %v484 = vpop.f32.mrf.mxu0
      %485 = vmatprep.mubr.f32.mxu0 0.0
      %486 = vmatmul.mubr.f32.gmra.mxu0 %v368
      %v487 = vpop.f32.mrf.mxu0
      %v488 = vadd.f32 %v361, %v487
      %v489 = vpop.f32.mrf.mxu0
      %490 = vmatprep.mubr.f32.mxu0 0.0
      %491 = vmatmul.mubr.f32.gmra.mxu0 %v371
      %v492 = vpop.f32.mrf.mxu0
      %v493 = vadd.f32 %v361, %v492
      %v494 = vpop.f32.mrf.mxu0
      %495 = vmatprep.mubr.f32.mxu0 0.0
      %496 = vmatmul.mubr.f32.gmra.mxu0 %v374
      %v497 = vpop.f32.mrf.mxu0
      %v498 = vadd.f32 %v361, %v497
      %v499 = vpop.f32.mrf.mxu0
      %500 = vmatprep.mubr.f32.mxu0 0.0
      %501 = vmatmul.mubr.f32.gmra.mxu0 %v377
      %v502 = vpop.f32.mrf.mxu0
      %v503 = vadd.f32 %v361, %v502
      %v504 = vpop.f32.mrf.mxu0
      %505 = vmatprep.mubr.f32.mxu0 0.0
      %506 = vmatmul.mubr.f32.gmra.mxu0 %v380
      %v507 = vpop.f32.mrf.mxu0
      %v508 = vadd.f32 %v361, %v507
      %v509 = vpop.f32.mrf.mxu0
      %510 = vmatprep.mubr.f32.mxu0 0.0
      %511 = vmatmul.mubr.f32.gmra.mxu0 %v383
      %v512 = vpop.f32.mrf.mxu0
      %v513 = vadd.f32 %v361, %v512
      %v514 = vpop.f32.mrf.mxu0
      %515 = vmatprep.mubr.f32.mxu0 0.0
      %516 = vmatmul.mubr.f32.gmra.mxu0 %v386
      %v517 = vpop.f32.mrf.mxu0
      %v518 = vadd.f32 %v361, %v517
      %v519 = vpop.f32.mrf.mxu0
      %520 = vmatprep.mubr.f32.mxu0 0.0
      %521 = vmatmul.mubr.f32.gmra.mxu0 %v389
      %v522 = vpop.f32.mrf.mxu0
      %v523 = vadd.f32 %v361, %v522
      %v524 = vpop.f32.mrf.mxu0
      %525 = vmatprep.mubr.f32.mxu0 0.0
      %526 = vmatmul.mubr.f32.gmra.mxu0 %v392
      %v527 = vpop.f32.mrf.mxu0
      %v528 = vadd.f32 %v361, %v527
      %v529 = vpop.f32.mrf.mxu0
      %530 = vmatprep.mubr.f32.mxu0 0.0
      %531 = vmatmul.mubr.f32.gmra.mxu0 %v395
      %v532 = vpop.f32.mrf.mxu0
      %v533 = vadd.f32 %v361, %v532
      %v534 = vpop.f32.mrf.mxu0
      %535 = vmatprep.mubr.f32.mxu0 0.0
      %536 = vmatmul.mubr.f32.gmra.mxu0 %v398
      %v537 = vpop.f32.mrf.mxu0
      %v538 = vadd.f32 %v361, %v537
      %v539 = vpop.f32.mrf.mxu0
      %540 = vmatprep.mubr.f32.mxu0 0.0
      %541 = vmatmul.mubr.f32.gmra.mxu0 %v401
      %v542 = vpop.f32.mrf.mxu0
      %v543 = vadd.f32 %v361, %v542
      %v544 = vpop.f32.mrf.mxu0
      %545 = vmatprep.mubr.f32.mxu0 0.0
      %546 = vmatmul.mubr.f32.gmra.mxu0 %v404
      %v547 = vpop.f32.mrf.mxu0
      %v548 = vadd.f32 %v361, %v547
      %v549 = vpop.f32.mrf.mxu0
      %550 = vmatprep.mubr.f32.mxu0 0.0
      %551 = vmatmul.mubr.f32.gmra.mxu0 %v407
      %v552 = vpop.f32.mrf.mxu0
      %v553 = vadd.f32 %v361, %v552
      %v554 = vpop.f32.mrf.mxu0
      %555 = vmatprep.mubr.f32.mxu0 0.0
      %556 = vmatmul.mubr.f32.gmra.mxu0 %v410
      %v557 = vpop.f32.mrf.mxu0
      %v558 = vadd.f32 %v361, %v557
      %v559 = vpop.f32.mrf.mxu0
      %560 = vdwg.mxu0
      %v561 = vmax.f32 %v483, 0.0
      %v562 = vmax.f32 %v488, 0.0
      %v563 = vmax.f32 %v493, 0.0
      %v564 = vmax.f32 %v498, 0.0
      %v565 = vmax.f32 %v503, 0.0
      %v566 = vmax.f32 %v508, 0.0
      %v567 = vmax.f32 %v513, 0.0
      %v568 = vmax.f32 %v518, 0.0
      %v569 = vmax.f32 %v523, 0.0
      %v570 = vmax.f32 %v528, 0.0
      %v571 = vmax.f32 %v533, 0.0
      %v572 = vmax.f32 %v538, 0.0
      %v573 = vmax.f32 %v543, 0.0
      %v574 = vmax.f32 %v548, 0.0
      %v575 = vmax.f32 %v553, 0.0
      %v576 = vmax.f32 %v558, 0.0
      %v577 = vld [vmem:[%s3] sm:$0xff]
      %v578 = vld [vmem:[%s3 + $0x8] sm:$0xff]
      %v579 = vld [vmem:[%s3 + $0x10] sm:$0xff]
      %v580 = vld [vmem:[%s3 + $0x18] sm:$0xff]
      %v581 = vld [vmem:[%s3 + $0x20] sm:$0xff]
      %v582 = vld [vmem:[%s3 + $0x28] sm:$0xff]
      %v583 = vld [vmem:[%s3 + $0x30] sm:$0xff]
      %v584 = vld [vmem:[%s3 + $0x38] sm:$0xff]
      %v585 = vld [vmem:[%s4] sm:$0x1]
      %v587 = vlaneseq
      %v588 = vshrl.u32 %v587, 7
      %v589 = vsub.s32 0, %v588
      %v590 = vrot.slane %v585, %v589
      %vm592 = vcmask 523264
      %v594 = vsel %vm592, %v561, 0
      %v597 = vsel %vm592, %v562, 0
      %v600 = vsel %vm592, %v563, 0
      %v603 = vsel %vm592, %v564, 0
      %v606 = vsel %vm592, %v565, 0
      %v609 = vsel %vm592, %v566, 0
      %v612 = vsel %vm592, %v567, 0
      %v615 = vsel %vm592, %v568, 0
      %v618 = vsel %vm592, %v569, 0
      %v621 = vsel %vm592, %v570, 0
      %v624 = vsel %vm592, %v571, 0
      %v627 = vsel %vm592, %v572, 0
      %v630 = vsel %vm592, %v573, 0
      %v633 = vsel %vm592, %v574, 0
      %v636 = vsel %vm592, %v575, 0
      %v639 = vsel %vm592, %v576, 0
      %641 = vmatprep.subr.mxu0 0.0
      %642 = vmatpush1.msra.mxu0 0.0
      %643 = vmatprep.subr.mxu0 0.0
      %644 = vmatpush1.msra.mxu0 0.0
      %645 = vmatprep.subr.mxu0 0.0
      %646 = vmatpush1.msra.mxu0 0.0
      %647 = vmatprep.subr.mxu0 0.0
      %648 = vmatpush1.msra.mxu0 0.0
      %649 = vmatprep.subr.mxu0 0.0
      %650 = vmatpush1.msra.mxu0 0.0
      %651 = vmatprep.subr.mxu0 0.0
      %652 = vmatpush1.msra.mxu0 0.0
      %653 = vmatprep.subr.mxu0 0.0
      %654 = vmatpush1.msra.mxu0 0.0
      %655 = vmatprep.subr.mxu0 0.0
      %656 = vmatpush1.msra.mxu0 0.0
      %657 = vmatprep.subr.mxu0 0.0
      %658 = vmatpush1.msra.mxu0 %v584
      %659 = vmatprep.subr.mxu0 0.0
      %660 = vmatpush1.msra.mxu0 %v583
      %661 = vmatprep.subr.mxu0 0.0
      %662 = vmatpush1.msra.mxu0 %v582
      %663 = vmatprep.subr.mxu0 0.0
      %664 = vmatpush1.msra.mxu0 %v581
      %665 = vmatprep.subr.mxu0 0.0
      %666 = vmatpush1.msra.mxu0 %v580
      %667 = vmatprep.subr.mxu0 0.0
      %668 = vmatpush1.msra.mxu0 %v579
      %669 = vmatprep.subr.mxu0 0.0
      %670 = vmatpush1.msra.mxu0 %v578
      %671 = vmatprep.subr.mxu0 0.0
      %672 = vmatpush1.msra.mxu0 %v577
      %673 = vmatprep.subr.mxu0 0.0
      %674 = vmatpush2.msra.mxu0 0.0
      %675 = vmatprep.subr.mxu0 0.0
      %676 = vmatpush2.msra.mxu0 0.0
      %677 = vmatprep.subr.mxu0 0.0
      %678 = vmatpush2.msra.mxu0 0.0
      %679 = vmatprep.subr.mxu0 0.0
      %680 = vmatpush2.msra.mxu0 0.0
      %681 = vmatprep.subr.mxu0 0.0
      %682 = vmatpush2.msra.mxu0 0.0
      %683 = vmatprep.subr.mxu0 0.0
      %684 = vmatpush2.msra.mxu0 0.0
      %685 = vmatprep.subr.mxu0 0.0
      %686 = vmatpush2.msra.mxu0 0.0
      %687 = vmatprep.subr.mxu0 0.0
      %688 = vmatpush2.msra.mxu0 0.0
      %689 = vmatprep.subr.mxu0 0.0
      %690 = vmatpush2.msra.mxu0 0.0
      %691 = vmatprep.subr.mxu0 0.0
      %692 = vmatpush2.msra.mxu0 0.0
      %693 = vmatprep.subr.mxu0 0.0
      %694 = vmatpush2.msra.mxu0 0.0
      %695 = vmatprep.subr.mxu0 0.0
      %696 = vmatpush2.msra.mxu0 0.0
      %697 = vmatprep.subr.mxu0 0.0
      %698 = vmatpush2.msra.mxu0 0.0
      %699 = vmatprep.subr.mxu0 0.0
      %700 = vmatpush2.msra.mxu0 0.0
      %701 = vmatprep.subr.mxu0 0.0
      %702 = vmatpush2.msra.mxu0 0.0
      %703 = vmatprep.subr.mxu0 0.0
      %704 = vmatpush2.msra.mxu0 0.0
      %705 = vmatprep.mubr.f32.mxu0 0.0
      %706 = vmatmul.mubr.f32.gmra.mxu0 %v594
      %v707 = vpop.f32.mrf.mxu0
      %v708 = vadd.f32 %v590, %v707
      %v709 = vpop.f32.mrf.mxu0
      %710 = vmatprep.mubr.f32.mxu0 0.0
      %711 = vmatmul.mubr.f32.gmra.mxu0 %v597
      %v712 = vpop.f32.mrf.mxu0
      %v713 = vadd.f32 %v590, %v712
      %v714 = vpop.f32.mrf.mxu0
      %715 = vmatprep.mubr.f32.mxu0 0.0
      %716 = vmatmul.mubr.f32.gmra.mxu0 %v600
      %v717 = vpop.f32.mrf.mxu0
      %v718 = vadd.f32 %v590, %v717
      %v719 = vpop.f32.mrf.mxu0
      %720 = vmatprep.mubr.f32.mxu0 0.0
      %721 = vmatmul.mubr.f32.gmra.mxu0 %v603
      %v722 = vpop.f32.mrf.mxu0
      %v723 = vadd.f32 %v590, %v722
      %v724 = vpop.f32.mrf.mxu0
      %725 = vmatprep.mubr.f32.mxu0 0.0
      %726 = vmatmul.mubr.f32.gmra.mxu0 %v606
      %v727 = vpop.f32.mrf.mxu0
      %v728 = vadd.f32 %v590, %v727
      %v729 = vpop.f32.mrf.mxu0
      %730 = vmatprep.mubr.f32.mxu0 0.0
      %731 = vmatmul.mubr.f32.gmra.mxu0 %v609
      %v732 = vpop.f32.mrf.mxu0
      %v733 = vadd.f32 %v590, %v732
      %v734 = vpop.f32.mrf.mxu0
      %735 = vmatprep.mubr.f32.mxu0 0.0
      %736 = vmatmul.mubr.f32.gmra.mxu0 %v612
      %v737 = vpop.f32.mrf.mxu0
      %v738 = vadd.f32 %v590, %v737
      %v739 = vpop.f32.mrf.mxu0
      %740 = vmatprep.mubr.f32.mxu0 0.0
      %741 = vmatmul.mubr.f32.gmra.mxu0 %v615
      %v742 = vpop.f32.mrf.mxu0
      %v743 = vadd.f32 %v590, %v742
      %v744 = vpop.f32.mrf.mxu0
      %745 = vmatprep.mubr.f32.mxu0 0.0
      %746 = vmatmul.mubr.f32.gmra.mxu0 %v618
      %v747 = vpop.f32.mrf.mxu0
      %v748 = vadd.f32 %v590, %v747
      %v749 = vpop.f32.mrf.mxu0
      %750 = vmatprep.mubr.f32.mxu0 0.0
      %751 = vmatmul.mubr.f32.gmra.mxu0 %v621
      %v752 = vpop.f32.mrf.mxu0
      %v753 = vadd.f32 %v590, %v752
      %v754 = vpop.f32.mrf.mxu0
      %755 = vmatprep.mubr.f32.mxu0 0.0
      %756 = vmatmul.mubr.f32.gmra.mxu0 %v624
      %v757 = vpop.f32.mrf.mxu0
      %v758 = vadd.f32 %v590, %v757
      %v759 = vpop.f32.mrf.mxu0
      %760 = vmatprep.mubr.f32.mxu0 0.0
      %761 = vmatmul.mubr.f32.gmra.mxu0 %v627
      %v762 = vpop.f32.mrf.mxu0
      %v763 = vadd.f32 %v590, %v762
      %v764 = vpop.f32.mrf.mxu0
      %765 = vmatprep.mubr.f32.mxu0 0.0
      %766 = vmatmul.mubr.f32.gmra.mxu0 %v630
      %v767 = vpop.f32.mrf.mxu0
      %v768 = vadd.f32 %v590, %v767
      %v769 = vpop.f32.mrf.mxu0
      %770 = vmatprep.mubr.f32.mxu0 0.0
      %771 = vmatmul.mubr.f32.gmra.mxu0 %v633
      %v772 = vpop.f32.mrf.mxu0
      %v773 = vadd.f32 %v590, %v772
      %v774 = vpop.f32.mrf.mxu0
      %775 = vmatprep.mubr.f32.mxu0 0.0
      %776 = vmatmul.mubr.f32.gmra.mxu0 %v636
      %v777 = vpop.f32.mrf.mxu0
      %v778 = vadd.f32 %v590, %v777
      %v779 = vpop.f32.mrf.mxu0
      %780 = vmatprep.mubr.f32.mxu0 0.0
      %781 = vmatmul.mubr.f32.gmra.mxu0 %v639
      %v782 = vpop.f32.mrf.mxu0
      %v783 = vadd.f32 %v590, %v782
      %v784 = vpop.f32.mrf.mxu0
      %785 = vdwg.mxu0
      %v786 = vmax.f32 %v708, 0.0
      %v787 = vmax.f32 %v713, 0.0
      %v788 = vmax.f32 %v718, 0.0
      %v789 = vmax.f32 %v723, 0.0
      %v790 = vmax.f32 %v728, 0.0
      %v791 = vmax.f32 %v733, 0.0
      %v792 = vmax.f32 %v738, 0.0
      %v793 = vmax.f32 %v743, 0.0
      %v794 = vmax.f32 %v748, 0.0
      %v795 = vmax.f32 %v753, 0.0
      %v796 = vmax.f32 %v758, 0.0
      %v797 = vmax.f32 %v763, 0.0
      %v798 = vmax.f32 %v768, 0.0
      %v799 = vmax.f32 %v773, 0.0
      %v800 = vmax.f32 %v778, 0.0
      %v801 = vmax.f32 %v783, 0.0
      %v802 = vld [vmem:[%s5] sm:$0x1]
      %v804 = vlaneseq
      %v805 = vshrl.u32 %v804, 7
      %v806 = vsub.s32 0, %v805
      %v807 = vrot.slane %v802, %v806
      %v809 = vmul.f32 %v786, %v807
      %v810 = vmul.f32 %v787, %v807
      %v811 = vmul.f32 %v788, %v807
      %v812 = vmul.f32 %v789, %v807
      %v813 = vmul.f32 %v790, %v807
      %v814 = vmul.f32 %v791, %v807
      %v815 = vmul.f32 %v792, %v807
      %v816 = vmul.f32 %v793, %v807
      %v817 = vmul.f32 %v794, %v807
      %v818 = vmul.f32 %v795, %v807
      %v819 = vmul.f32 %v796, %v807
      %v820 = vmul.f32 %v797, %v807
      %v821 = vmul.f32 %v798, %v807
      %v822 = vmul.f32 %v799, %v807
      %v823 = vmul.f32 %v800, %v807
      %v824 = vmul.f32 %v801, %v807
      %vm825 = vcmask 261120
      %v826 = vsel %vm825, %v809, 0.0
      %827 = vadd.xlane.f32.xlu0 %v826
      %v828 = vpop.xlane.xlu0 %827
      %v829 = vsel %vm825, %v810, 0.0
      %830 = vadd.xlane.f32.xlu0 %v829
      %v831 = vpop.xlane.xlu0 %830
      %v832 = vsel %vm825, %v811, 0.0
      %833 = vadd.xlane.f32.xlu0 %v832
      %v834 = vpop.xlane.xlu0 %833
      %v835 = vsel %vm825, %v812, 0.0
      %836 = vadd.xlane.f32.xlu0 %v835
      %v837 = vpop.xlane.xlu0 %836
      %v838 = vsel %vm825, %v813, 0.0
      %839 = vadd.xlane.f32.xlu0 %v838
      %v840 = vpop.xlane.xlu0 %839
      %v841 = vsel %vm825, %v814, 0.0
      %842 = vadd.xlane.f32.xlu0 %v841
      %v843 = vpop.xlane.xlu0 %842
      %v844 = vsel %vm825, %v815, 0.0
      %845 = vadd.xlane.f32.xlu0 %v844
      %v846 = vpop.xlane.xlu0 %845
      %v847 = vsel %vm825, %v816, 0.0
      %848 = vadd.xlane.f32.xlu0 %v847
      %v849 = vpop.xlane.xlu0 %848
      %v850 = vsel %vm825, %v817, 0.0
      %851 = vadd.xlane.f32.xlu0 %v850
      %v852 = vpop.xlane.xlu0 %851
      %v853 = vsel %vm825, %v818, 0.0
      %854 = vadd.xlane.f32.xlu0 %v853
      %v855 = vpop.xlane.xlu0 %854
      %v856 = vsel %vm825, %v819, 0.0
      %857 = vadd.xlane.f32.xlu0 %v856
      %v858 = vpop.xlane.xlu0 %857
      %v859 = vsel %vm825, %v820, 0.0
      %860 = vadd.xlane.f32.xlu0 %v859
      %v861 = vpop.xlane.xlu0 %860
      %v862 = vsel %vm825, %v821, 0.0
      %863 = vadd.xlane.f32.xlu0 %v862
      %v864 = vpop.xlane.xlu0 %863
      %v865 = vsel %vm825, %v822, 0.0
      %866 = vadd.xlane.f32.xlu0 %v865
      %v867 = vpop.xlane.xlu0 %866
      %v868 = vsel %vm825, %v823, 0.0
      %869 = vadd.xlane.f32.xlu0 %v868
      %v870 = vpop.xlane.xlu0 %869
      %v871 = vsel %vm825, %v824, 0.0
      %872 = vadd.xlane.f32.xlu0 %v871
      %v873 = vpop.xlane.xlu0 %872
      %v874 = vld [vmem:[#allocation3] sm:$0x1]
      %v876 = vlaneseq
      %v877 = vshrl.u32 %v876, 7
      %v878 = vsub.s32 0, %v877
      %v879 = vrot.slane %v874, %v878
      %v881 = vadd.f32 %v828, %v879
      %v882 = vadd.f32 %v831, %v879
      %v883 = vadd.f32 %v834, %v879
      %v884 = vadd.f32 %v837, %v879
      %v885 = vadd.f32 %v840, %v879
      %v886 = vadd.f32 %v843, %v879
      %v887 = vadd.f32 %v846, %v879
      %v888 = vadd.f32 %v849, %v879
      %v889 = vadd.f32 %v852, %v879
      %v890 = vadd.f32 %v855, %v879
      %v891 = vadd.f32 %v858, %v879
      %v892 = vadd.f32 %v861, %v879
      %v893 = vadd.f32 %v864, %v879
      %v894 = vadd.f32 %v867, %v879
      %v895 = vadd.f32 %v870, %v879
      %v896 = vadd.f32 %v873, %v879
      %v897 = vmax.f32 %v881, 0.0
      %v898 = vmax.f32 %v882, 0.0
      %v899 = vmax.f32 %v883, 0.0
      %v900 = vmax.f32 %v884, 0.0
      %v901 = vmax.f32 %v885, 0.0
      %v902 = vmax.f32 %v886, 0.0
      %v903 = vmax.f32 %v887, 0.0
      %v904 = vmax.f32 %v888, 0.0
      %v905 = vmax.f32 %v889, 0.0
      %v906 = vmax.f32 %v890, 0.0
      %v907 = vmax.f32 %v891, 0.0
      %v908 = vmax.f32 %v892, 0.0
      %v909 = vmax.f32 %v893, 0.0
      %v910 = vmax.f32 %v894, 0.0
      %v911 = vmax.f32 %v895, 0.0
      %v912 = vmax.f32 %v896, 0.0
      %913 = vrot.lane.b32.xlu0 %v338, 115
      %v914 = vpop.permute.xlu0 %913
      %915 = vrot.lane.b32.xlu0 %v339, 115
      %v916 = vpop.permute.xlu0 %915
      %917 = vrot.lane.b32.xlu0 %v340, 115
      %v918 = vpop.permute.xlu0 %917
      %919 = vrot.lane.b32.xlu0 %v341, 115
      %v920 = vpop.permute.xlu0 %919
      %921 = vrot.lane.b32.xlu0 %v342, 115
      %v922 = vpop.permute.xlu0 %921
      %923 = vrot.lane.b32.xlu0 %v343, 115
      %v924 = vpop.permute.xlu0 %923
      %925 = vrot.lane.b32.xlu0 %v344, 115
      %v926 = vpop.permute.xlu0 %925
      %927 = vrot.lane.b32.xlu0 %v345, 115
      %v928 = vpop.permute.xlu0 %927
      %929 = vrot.lane.b32.xlu0 %v346, 115
      %v930 = vpop.permute.xlu0 %929
      %931 = vrot.lane.b32.xlu0 %v347, 115
      %v932 = vpop.permute.xlu0 %931
      %933 = vrot.lane.b32.xlu0 %v348, 115
      %v934 = vpop.permute.xlu0 %933
      %935 = vrot.lane.b32.xlu0 %v349, 115
      %v936 = vpop.permute.xlu0 %935
      %937 = vrot.lane.b32.xlu0 %v350, 115
      %v938 = vpop.permute.xlu0 %937
      %939 = vrot.lane.b32.xlu0 %v351, 115
      %v940 = vpop.permute.xlu0 %939
      %941 = vrot.lane.b32.xlu0 %v352, 115
      %v942 = vpop.permute.xlu0 %941
      %943 = vrot.lane.b32.xlu0 %v353, 115
      %v944 = vpop.permute.xlu0 %943
      %v961 = vmul.f32 %v881, %v914
      %v962 = vmul.f32 %v882, %v916
      %v963 = vmul.f32 %v883, %v918
      %v964 = vmul.f32 %v884, %v920
      %v965 = vmul.f32 %v885, %v922
      %v966 = vmul.f32 %v886, %v924
      %v967 = vmul.f32 %v887, %v926
      %v968 = vmul.f32 %v888, %v928
      %v969 = vmul.f32 %v889, %v930
      %v970 = vmul.f32 %v890, %v932
      %v971 = vmul.f32 %v891, %v934
      %v972 = vmul.f32 %v892, %v936
      %v973 = vmul.f32 %v893, %v938
      %v974 = vmul.f32 %v894, %v940
      %v975 = vmul.f32 %v895, %v942
      %v976 = vmul.f32 %v896, %v944
      %v977 = vsub.f32 %v897, %v961
      %v978 = vsub.f32 %v898, %v962
      %v979 = vsub.f32 %v899, %v963
      %v980 = vsub.f32 %v900, %v964
      %v981 = vsub.f32 %v901, %v965
      %v982 = vsub.f32 %v902, %v966
      %v983 = vsub.f32 %v903, %v967
      %v984 = vsub.f32 %v904, %v968
      %v985 = vsub.f32 %v905, %v969
      %v986 = vsub.f32 %v906, %v970
      %v987 = vsub.f32 %v907, %v971
      %v988 = vsub.f32 %v908, %v972
      %v989 = vsub.f32 %v909, %v973
      %v990 = vsub.f32 %v910, %v974
      %v991 = vsub.f32 %v911, %v975
      %v992 = vsub.f32 %v912, %v976
      %v993 = vand.u32 2147483647, %v881
      %v994 = vand.u32 2147483647, %v882
      %v995 = vand.u32 2147483647, %v883
      %v996 = vand.u32 2147483647, %v884
      %v997 = vand.u32 2147483647, %v885
      %v998 = vand.u32 2147483647, %v886
      %v999 = vand.u32 2147483647, %v887
      %v1000 = vand.u32 2147483647, %v888
      %v1001 = vand.u32 2147483647, %v889
      %v1002 = vand.u32 2147483647, %v890
      %v1003 = vand.u32 2147483647, %v891
      %v1004 = vand.u32 2147483647, %v892
      %v1005 = vand.u32 2147483647, %v893
      %v1006 = vand.u32 2147483647, %v894
      %v1007 = vand.u32 2147483647, %v895
      %v1008 = vand.u32 2147483647, %v896
      %v1009 = vsub.f32 0.0, %v993
      %v1010 = vsub.f32 0.0, %v994
      %v1011 = vsub.f32 0.0, %v995
      %v1012 = vsub.f32 0.0, %v996
      %v1013 = vsub.f32 0.0, %v997
      %v1014 = vsub.f32 0.0, %v998
      %v1015 = vsub.f32 0.0, %v999
      %v1016 = vsub.f32 0.0, %v1000
      %v1017 = vsub.f32 0.0, %v1001
      %v1018 = vsub.f32 0.0, %v1002
      %v1019 = vsub.f32 0.0, %v1003
      %v1020 = vsub.f32 0.0, %v1004
      %v1021 = vsub.f32 0.0, %v1005
      %v1022 = vsub.f32 0.0, %v1006
      %v1023 = vsub.f32 0.0, %v1007
      %v1024 = vsub.f32 0.0, %v1008
      %v1025 = vmul.f32 %v1009, 1.442695
      %v1026 = vpow.pop %v1025
      %v1027 = vmul.f32 %v1010, 1.442695
      %v1028 = vpow.pop %v1027
      %v1029 = vmul.f32 %v1011, 1.442695
      %v1030 = vpow.pop %v1029
      %v1031 = vmul.f32 %v1012, 1.442695
      %v1032 = vpow.pop %v1031
      %v1033 = vmul.f32 %v1013, 1.442695
      %v1034 = vpow.pop %v1033
      %v1035 = vmul.f32 %v1014, 1.442695
      %v1036 = vpow.pop %v1035
      %v1037 = vmul.f32 %v1015, 1.442695
      %v1038 = vpow.pop %v1037
      %v1039 = vmul.f32 %v1016, 1.442695
      %v1040 = vpow.pop %v1039
      %v1041 = vmul.f32 %v1017, 1.442695
      %v1042 = vpow.pop %v1041
      %v1043 = vmul.f32 %v1018, 1.442695
      %v1044 = vpow.pop %v1043
      %v1045 = vmul.f32 %v1019, 1.442695
      %v1046 = vpow.pop %v1045
      %v1047 = vmul.f32 %v1020, 1.442695
      %v1048 = vpow.pop %v1047
      %v1049 = vmul.f32 %v1021, 1.442695
      %v1050 = vpow.pop %v1049
      %v1051 = vmul.f32 %v1022, 1.442695
      %v1052 = vpow.pop %v1051
      %v1053 = vmul.f32 %v1023, 1.442695
      %v1054 = vpow.pop %v1053
      %v1055 = vmul.f32 %v1024, 1.442695
      %v1056 = vpow.pop %v1055
      %v1057 = vadd.f32 %v1026, 1.0
      %v1058 = vlog2.pop %v1057
      %v1059 = vmul.f32 %v1058, 0.6931472
      %v1060 = vmul.f32 -0.5, %v1026
      %v1061 = vadd.f32 %v1060, 1.0
      %v1062 = vmul.f32 %v1061, %v1026
      %v1063 = vand.u32 2147483647, %v1026
      %vm1064 = vcmp.lt.f32.partialorder %v1063, 0.0004427343
      %v1065 = vsel %vm1064, %v1062, %v1059
      %v1066 = vadd.f32 %v1028, 1.0
      %v1067 = vlog2.pop %v1066
      %v1068 = vmul.f32 %v1067, 0.6931472
      %v1069 = vmul.f32 -0.5, %v1028
      %v1070 = vadd.f32 %v1069, 1.0
      %v1071 = vmul.f32 %v1070, %v1028
      %v1072 = vand.u32 2147483647, %v1028
      %vm1073 = vcmp.lt.f32.partialorder %v1072, 0.0004427343
      %v1074 = vsel %vm1073, %v1071, %v1068
      %v1075 = vadd.f32 %v1030, 1.0
      %v1076 = vlog2.pop %v1075
      %v1077 = vmul.f32 %v1076, 0.6931472
      %v1078 = vmul.f32 -0.5, %v1030
      %v1079 = vadd.f32 %v1078, 1.0
      %v1080 = vmul.f32 %v1079, %v1030
      %v1081 = vand.u32 2147483647, %v1030
      %vm1082 = vcmp.lt.f32.partialorder %v1081, 0.0004427343
      %v1083 = vsel %vm1082, %v1080, %v1077
      %v1084 = vadd.f32 %v1032, 1.0
      %v1085 = vlog2.pop %v1084
      %v1086 = vmul.f32 %v1085, 0.6931472
      %v1087 = vmul.f32 -0.5, %v1032
      %v1088 = vadd.f32 %v1087, 1.0
      %v1089 = vmul.f32 %v1088, %v1032
      %v1090 = vand.u32 2147483647, %v1032
      %vm1091 = vcmp.lt.f32.partialorder %v1090, 0.0004427343
      %v1092 = vsel %vm1091, %v1089, %v1086
      %v1093 = vadd.f32 %v1034, 1.0
      %v1094 = vlog2.pop %v1093
      %v1095 = vmul.f32 %v1094, 0.6931472
      %v1096 = vmul.f32 -0.5, %v1034
      %v1097 = vadd.f32 %v1096, 1.0
      %v1098 = vmul.f32 %v1097, %v1034
      %v1099 = vand.u32 2147483647, %v1034
      %vm1100 = vcmp.lt.f32.partialorder %v1099, 0.0004427343
      %v1101 = vsel %vm1100, %v1098, %v1095
      %v1102 = vadd.f32 %v1036, 1.0
      %v1103 = vlog2.pop %v1102
      %v1104 = vmul.f32 %v1103, 0.6931472
      %v1105 = vmul.f32 -0.5, %v1036
      %v1106 = vadd.f32 %v1105, 1.0
      %v1107 = vmul.f32 %v1106, %v1036
      %v1108 = vand.u32 2147483647, %v1036
      %vm1109 = vcmp.lt.f32.partialorder %v1108, 0.0004427343
      %v1110 = vsel %vm1109, %v1107, %v1104
      %v1111 = vadd.f32 %v1038, 1.0
      %v1112 = vlog2.pop %v1111
      %v1113 = vmul.f32 %v1112, 0.6931472
      %v1114 = vmul.f32 -0.5, %v1038
      %v1115 = vadd.f32 %v1114, 1.0
      %v1116 = vmul.f32 %v1115, %v1038
      %v1117 = vand.u32 2147483647, %v1038
      %vm1118 = vcmp.lt.f32.partialorder %v1117, 0.0004427343
      %v1119 = vsel %vm1118, %v1116, %v1113
      %v1120 = vadd.f32 %v1040, 1.0
      %v1121 = vlog2.pop %v1120
      %v1122 = vmul.f32 %v1121, 0.6931472
      %v1123 = vmul.f32 -0.5, %v1040
      %v1124 = vadd.f32 %v1123, 1.0
      %v1125 = vmul.f32 %v1124, %v1040
      %v1126 = vand.u32 2147483647, %v1040
      %vm1127 = vcmp.lt.f32.partialorder %v1126, 0.0004427343
      %v1128 = vsel %vm1127, %v1125, %v1122
      %v1129 = vadd.f32 %v1042, 1.0
      %v1130 = vlog2.pop %v1129
      %v1131 = vmul.f32 %v1130, 0.6931472
      %v1132 = vmul.f32 -0.5, %v1042
      %v1133 = vadd.f32 %v1132, 1.0
      %v1134 = vmul.f32 %v1133, %v1042
      %v1135 = vand.u32 2147483647, %v1042
      %vm1136 = vcmp.lt.f32.partialorder %v1135, 0.0004427343
      %v1137 = vsel %vm1136, %v1134, %v1131
      %v1138 = vadd.f32 %v1044, 1.0
      %v1139 = vlog2.pop %v1138
      %v1140 = vmul.f32 %v1139, 0.6931472
      %v1141 = vmul.f32 -0.5, %v1044
      %v1142 = vadd.f32 %v1141, 1.0
      %v1143 = vmul.f32 %v1142, %v1044
      %v1144 = vand.u32 2147483647, %v1044
      %vm1145 = vcmp.lt.f32.partialorder %v1144, 0.0004427343
      %v1146 = vsel %vm1145, %v1143, %v1140
      %v1147 = vadd.f32 %v1046, 1.0
      %v1148 = vlog2.pop %v1147
      %v1149 = vmul.f32 %v1148, 0.6931472
      %v1150 = vmul.f32 -0.5, %v1046
      %v1151 = vadd.f32 %v1150, 1.0
      %v1152 = vmul.f32 %v1151, %v1046
      %v1153 = vand.u32 2147483647, %v1046
      %vm1154 = vcmp.lt.f32.partialorder %v1153, 0.0004427343
      %v1155 = vsel %vm1154, %v1152, %v1149
      %v1156 = vadd.f32 %v1048, 1.0
      %v1157 = vlog2.pop %v1156
      %v1158 = vmul.f32 %v1157, 0.6931472
      %v1159 = vmul.f32 -0.5, %v1048
      %v1160 = vadd.f32 %v1159, 1.0
      %v1161 = vmul.f32 %v1160, %v1048
      %v1162 = vand.u32 2147483647, %v1048
      %vm1163 = vcmp.lt.f32.partialorder %v1162, 0.0004427343
      %v1164 = vsel %vm1163, %v1161, %v1158
      %v1165 = vadd.f32 %v1050, 1.0
      %v1166 = vlog2.pop %v1165
      %v1167 = vmul.f32 %v1166, 0.6931472
      %v1168 = vmul.f32 -0.5, %v1050
      %v1169 = vadd.f32 %v1168, 1.0
      %v1170 = vmul.f32 %v1169, %v1050
      %v1171 = vand.u32 2147483647, %v1050
      %vm1172 = vcmp.lt.f32.partialorder %v1171, 0.0004427343
      %v1173 = vsel %vm1172, %v1170, %v1167
      %v1174 = vadd.f32 %v1052, 1.0
      %v1175 = vlog2.pop %v1174
      %v1176 = vmul.f32 %v1175, 0.6931472
      %v1177 = vmul.f32 -0.5, %v1052
      %v1178 = vadd.f32 %v1177, 1.0
      %v1179 = vmul.f32 %v1178, %v1052
      %v1180 = vand.u32 2147483647, %v1052
      %vm1181 = vcmp.lt.f32.partialorder %v1180, 0.0004427343
      %v1182 = vsel %vm1181, %v1179, %v1176
      %v1183 = vadd.f32 %v1054, 1.0
      %v1184 = vlog2.pop %v1183
      %v1185 = vmul.f32 %v1184, 0.6931472
      %v1186 = vmul.f32 -0.5, %v1054
      %v1187 = vadd.f32 %v1186, 1.0
      %v1188 = vmul.f32 %v1187, %v1054
      %v1189 = vand.u32 2147483647, %v1054
      %vm1190 = vcmp.lt.f32.partialorder %v1189, 0.0004427343
      %v1191 = vsel %vm1190, %v1188, %v1185
      %v1192 = vadd.f32 %v1056, 1.0
      %v1193 = vlog2.pop %v1192
      %v1194 = vmul.f32 %v1193, 0.6931472
      %v1195 = vmul.f32 -0.5, %v1056
      %v1196 = vadd.f32 %v1195, 1.0
      %v1197 = vmul.f32 %v1196, %v1056
      %v1198 = vand.u32 2147483647, %v1056
      %vm1199 = vcmp.lt.f32.partialorder %v1198, 0.0004427343
      %v1200 = vsel %vm1199, %v1197, %v1194
      %v1201 = vadd.f32 %v977, %v1065
      %v1202 = vadd.f32 %v978, %v1074
      %v1203 = vadd.f32 %v979, %v1083
      %v1204 = vadd.f32 %v980, %v1092
      %v1205 = vadd.f32 %v981, %v1101
      %v1206 = vadd.f32 %v982, %v1110
      %v1207 = vadd.f32 %v983, %v1119
      %v1208 = vadd.f32 %v984, %v1128
      %v1209 = vadd.f32 %v985, %v1137
      %v1210 = vadd.f32 %v986, %v1146
      %v1211 = vadd.f32 %v987, %v1155
      %v1212 = vadd.f32 %v988, %v1164
      %v1213 = vadd.f32 %v989, %v1173
      %v1214 = vadd.f32 %v990, %v1182
      %v1215 = vadd.f32 %v991, %v1191
      %v1216 = vadd.f32 %v992, %v1200
      %s1217 = sadd.s32 %s24, %s25
      %s1218 = sadd.s32 %s1217, 1
      %s1219 = smul.u32 %s1218, 128
      %p1220 = scmp.gt.s32.totalorder %s1219, 200
      // Predicated region
      $region53: #{tpu_custom_call.1} parent=47 // pred_check
        %p1221 = pneg %p1220
      $region54: #{tpu_custom_call.1} parent=47 // pred_check_branch
        %1223 = sbr.rel (%p1221) target = $region56
      $region55: #{tpu_custom_call.1} parent=47 // pred_region
        %s1224 = smul.u32 %s1217, 128
        %v1225 = vlaneseq
        %v1226 = vshrl.u32 %v1225, 7
        %v1227 = vadd.s32 %v1226, 8
        %v1228 = vadd.s32 %v1226, 16
        %v1229 = vadd.s32 %v1226, 24
        %v1230 = vadd.s32 %v1226, 32
        %v1231 = vadd.s32 %v1226, 40
        %v1232 = vadd.s32 %v1226, 48
        %v1233 = vadd.s32 %v1226, 56
        %v1234 = vadd.s32 %v1226, 64
        %v1235 = vadd.s32 %v1226, 72
        %v1236 = vadd.s32 %v1226, 80
        %v1237 = vadd.s32 %v1226, 88
        %v1238 = vadd.s32 %v1226, 96
        %v1239 = vadd.s32 %v1226, 104
        %v1240 = vadd.s32 %v1226, 112
        %v1241 = vadd.s32 %v1226, 120
        %v1242 = vstv %s1224
        %v1243 = vadd.s32 %v1242, %v1226
        %v1244 = vadd.s32 %v1242, %v1227
        %v1245 = vadd.s32 %v1242, %v1228
        %v1246 = vadd.s32 %v1242, %v1229
        %v1247 = vadd.s32 %v1242, %v1230
        %v1248 = vadd.s32 %v1242, %v1231
        %v1249 = vadd.s32 %v1242, %v1232
        %v1250 = vadd.s32 %v1242, %v1233
        %v1251 = vadd.s32 %v1242, %v1234
        %v1252 = vadd.s32 %v1242, %v1235
        %v1253 = vadd.s32 %v1242, %v1236
        %v1254 = vadd.s32 %v1242, %v1237
        %v1255 = vadd.s32 %v1242, %v1238
        %v1256 = vadd.s32 %v1242, %v1239
        %v1257 = vadd.s32 %v1242, %v1240
        %v1258 = vadd.s32 %v1242, %v1241
        %vm1259 = vcmp.lt.s32.totalorder %v1243, 200
        %vm1260 = vcmp.lt.s32.totalorder %v1244, 200
        %vm1261 = vcmp.lt.s32.totalorder %v1245, 200
        %vm1262 = vcmp.lt.s32.totalorder %v1246, 200
        %vm1263 = vcmp.lt.s32.totalorder %v1247, 200
        %vm1264 = vcmp.lt.s32.totalorder %v1248, 200
        %vm1265 = vcmp.lt.s32.totalorder %v1249, 200
        %vm1266 = vcmp.lt.s32.totalorder %v1250, 200
        %vm1267 = vcmp.lt.s32.totalorder %v1251, 200
        %vm1268 = vcmp.lt.s32.totalorder %v1252, 200
        %vm1269 = vcmp.lt.s32.totalorder %v1253, 200
        %vm1270 = vcmp.lt.s32.totalorder %v1254, 200
        %vm1271 = vcmp.lt.s32.totalorder %v1255, 200
        %vm1272 = vcmp.lt.s32.totalorder %v1256, 200
        %vm1273 = vcmp.lt.s32.totalorder %v1257, 200
        %vm1274 = vcmp.lt.s32.totalorder %v1258, 200
        %v1275 = vsel %vm1259, %v1201, 0.0
        %v1276 = vsel %vm1260, %v1202, 0.0
        %v1277 = vsel %vm1261, %v1203, 0.0
        %v1278 = vsel %vm1262, %v1204, 0.0
        %v1279 = vsel %vm1263, %v1205, 0.0
        %v1280 = vsel %vm1264, %v1206, 0.0
        %v1281 = vsel %vm1265, %v1207, 0.0
        %v1282 = vsel %vm1266, %v1208, 0.0
        %v1283 = vsel %vm1267, %v1209, 0.0
        %v1284 = vsel %vm1268, %v1210, 0.0
        %v1285 = vsel %vm1269, %v1211, 0.0
        %v1286 = vsel %vm1270, %v1212, 0.0
        %v1287 = vsel %vm1271, %v1213, 0.0
        %v1288 = vsel %vm1272, %v1214, 0.0
        %v1289 = vsel %vm1273, %v1215, 0.0
        %v1290 = vsel %vm1274, %v1216, 0.0
        %v1291 = vld [vmem:[#allocation2] sm:$0x1]
        %vm1292 = vcmask 7168
        %v1293 = vsel %vm1292, %v1275, 0.0
        %v1294 = vsel %vm1292, %v1276, 0.0
        %v1295 = vadd.f32 %v1293, %v1294
        %v1296 = vsel %vm1292, %v1277, 0.0
        %v1297 = vadd.f32 %v1295, %v1296
        %v1298 = vsel %vm1292, %v1278, 0.0
        %v1299 = vadd.f32 %v1297, %v1298
        %v1300 = vsel %vm1292, %v1279, 0.0
        %v1301 = vadd.f32 %v1299, %v1300
        %v1302 = vsel %vm1292, %v1280, 0.0
        %v1303 = vadd.f32 %v1301, %v1302
        %v1304 = vsel %vm1292, %v1281, 0.0
        %v1305 = vadd.f32 %v1303, %v1304
        %v1306 = vsel %vm1292, %v1282, 0.0
        %v1307 = vadd.f32 %v1305, %v1306
        %v1308 = vsel %vm1292, %v1283, 0.0
        %v1309 = vadd.f32 %v1307, %v1308
        %v1310 = vsel %vm1292, %v1284, 0.0
        %v1311 = vadd.f32 %v1309, %v1310
        %v1312 = vsel %vm1292, %v1285, 0.0
        %v1313 = vadd.f32 %v1311, %v1312
        %v1314 = vsel %vm1292, %v1286, 0.0
        %v1315 = vadd.f32 %v1313, %v1314
        %v1316 = vsel %vm1292, %v1287, 0.0
        %v1317 = vadd.f32 %v1315, %v1316
        %v1318 = vsel %vm1292, %v1288, 0.0
        %v1319 = vadd.f32 %v1317, %v1318
        %v1320 = vsel %vm1292, %v1289, 0.0
        %v1321 = vadd.f32 %v1319, %v1320
        %v1322 = vsel %vm1292, %v1290, 0.0
        %v1323 = vadd.f32 %v1321, %v1322
        %1324 = vadd.xlane.f32.xlu0 %v1323
        %v1325 = vpop.xlane.xlu0 %1324
        %v1326 = vrot.slane %v1325, 4
        %v1327 = vadd.f32 %v1325, %v1326
        %v1328 = vrot.slane %v1327, 2
        %v1329 = vadd.f32 %v1327, %v1328
        %v1330 = vrot.slane %v1329, 1
        %v1331 = vadd.f32 %v1329, %v1330
        %s1332 = vtos %v1331
        %v1333 = vstv %s1332
        %v1334 = vadd.f32 %v1291, %v1333
        %vm1335 = vcmask 0
        %1336 = vst.msk [vmem:[#allocation2] sm:$0x1] %vm1335, %v1334
      $region56: #{tpu_custom_call.1} parent=47 // pred_fallthru
        _
      %p1337 = scmp.le.s32.totalorder %s1219, 200
      // Predicated region
      $region57: #{tpu_custom_call.1} parent=47 // pred_check
        %p1338 = pneg %p1337
      $region58: #{tpu_custom_call.1} parent=47 // pred_check_branch
        %1340 = sbr.rel (%p1338) target = $region60
      $region59: #{tpu_custom_call.1} parent=47 // pred_region
        %v1341 = vld [vmem:[#allocation2] sm:$0x1]
        %vm1342 = vcmask 7168
        %v1343 = vsel %vm1342, %v1201, 0.0
        %v1344 = vsel %vm1342, %v1202, 0.0
        %v1345 = vadd.f32 %v1343, %v1344
        %v1346 = vsel %vm1342, %v1203, 0.0
        %v1347 = vadd.f32 %v1345, %v1346
        %v1348 = vsel %vm1342, %v1204, 0.0
        %v1349 = vadd.f32 %v1347, %v1348
        %v1350 = vsel %vm1342, %v1205, 0.0
        %v1351 = vadd.f32 %v1349, %v1350
        %v1352 = vsel %vm1342, %v1206, 0.0
        %v1353 = vadd.f32 %v1351, %v1352
        %v1354 = vsel %vm1342, %v1207, 0.0
        %v1355 = vadd.f32 %v1353, %v1354
        %v1356 = vsel %vm1342, %v1208, 0.0
        %v1357 = vadd.f32 %v1355, %v1356
        %v1358 = vsel %vm1342, %v1209, 0.0
        %v1359 = vadd.f32 %v1357, %v1358
        %v1360 = vsel %vm1342, %v1210, 0.0
        %v1361 = vadd.f32 %v1359, %v1360
        %v1362 = vsel %vm1342, %v1211, 0.0
        %v1363 = vadd.f32 %v1361, %v1362
        %v1364 = vsel %vm1342, %v1212, 0.0
        %v1365 = vadd.f32 %v1363, %v1364
        %v1366 = vsel %vm1342, %v1213, 0.0
        %v1367 = vadd.f32 %v1365, %v1366
        %v1368 = vsel %vm1342, %v1214, 0.0
        %v1369 = vadd.f32 %v1367, %v1368
        %v1370 = vsel %vm1342, %v1215, 0.0
        %v1371 = vadd.f32 %v1369, %v1370
        %v1372 = vsel %vm1342, %v1216, 0.0
        %v1373 = vadd.f32 %v1371, %v1372
        %1374 = vadd.xlane.f32.xlu0 %v1373
        %v1375 = vpop.xlane.xlu0 %1374
        %v1376 = vrot.slane %v1375, 4
        %v1377 = vadd.f32 %v1375, %v1376
        %v1378 = vrot.slane %v1377, 2
        %v1379 = vadd.f32 %v1377, %v1378
        %v1380 = vrot.slane %v1379, 1
        %v1381 = vadd.f32 %v1379, %v1380
        %s1382 = vtos %v1381
        %v1383 = vstv %s1382
        %v1384 = vadd.f32 %v1341, %v1383
        %vm1385 = vcmask 0
        %1386 = vst.msk [vmem:[#allocation2] sm:$0x1] %vm1385, %v1384
      $region60: #{tpu_custom_call.1} parent=47 // pred_fallthru
        _
      // Predicated region
      $region61: #{tpu_custom_call.1} parent=47 // pred_check
        %p1387 = pneg %p332
      $region62: #{tpu_custom_call.1} parent=47 // pred_check_branch
        %1389 = sbr.rel (%p1387) target = $region64
      $region63: #{tpu_custom_call.1} parent=47 // pred_region
        %v1390 = vld [vmem:[#allocation2] sm:$0x1]
        %vm1391 = vcmask 0
        %1392 = vst.msk [vmem:[%s331] sm:$0x1] %vm1391, %v1390
      $region64: #{tpu_custom_call.1} parent=47 // pred_fallthru
        _
      %p1393 = scmp.lt.s32.totalorder %s24, 1
      %s1394 = scalar_select %p1393, %s24, 1
      %s1395 = scalar_lea.vmem %s7, %s1394
      // Predicated region
      $region65: #{tpu_custom_call.1} parent=47 // pred_check
        %p1396 = pneg %p208
      $region66: #{tpu_custom_call.1} parent=47 // pred_check_branch
        %1398 = sbr.rel (%p1396) target = $region68
      $region67: #{tpu_custom_call.1} parent=47 // pred_region
        _
      $region68: #{tpu_custom_call.1} parent=47 // pred_fallthru
        _
    $region48: #{tpu_custom_call.1} parent=5 // pred_fallthru
      _
    %p1399 = scmp.le.s32.totalorder 2, %s15
    // Predicated region
    $region69: #{tpu_custom_call.1} parent=5 // pred_check
      %p1400 = pneg %p1399
    $region70: #{tpu_custom_call.1} parent=5 // pred_check_branch
      %1402 = sbr.rel (%p1400) target = $region72
    $region71: #{tpu_custom_call.1} parent=5 // pred_region
      %s1403 = ssub.s32 %s15, 2
      // Predicated region
      $region73: #{tpu_custom_call.1} parent=71 // pred_check
        %p1404 = pneg %p214
      $region74: #{tpu_custom_call.1} parent=71 // pred_check_branch
        %1406 = sbr.rel (%p1404) target = $region76
      $region75: #{tpu_custom_call.1} parent=71 // pred_region
        %p1407 = scmp.lt.s32.totalorder %s26, 1
        %s1408 = scalar_select %p1407, %s26, 1
        %s1409 = scalar_lea.vmem %s7, %s1408
      $region76: #{tpu_custom_call.1} parent=71 // pred_fallthru
        _
    $region72: #{tpu_custom_call.1} parent=5 // pred_fallthru
      _
  $region6: #{tpu_custom_call.1} parent=0 // loop_footer
    %s19 = sadd.s32 1, %s15
  $region7: #{tpu_custom_call.1} parent=0 // loop_footer_branch
    %14 = sbr.rel target = $region3
  $region8: #{tpu_custom_call.1} parent=0 // loop_exit
    _

</llo_original>
